<compile_context>
chip_gen: v6e
topology: v6e:2x2x1
jax: 0.10.0
libtpu: 0.0.40
codegen_flags: <defaults>
</compile_context>

<pallas_src>
import functools

import jax
import jax.numpy as jnp
from jax.experimental import pallas as pl
from jax.experimental.pallas import tpu as pltpu


def _encoder_kernel(lens_ref,                        # scalar prefetch: (B,) int32 in SMEM
                    x_ref, noise_ref,                # per-batch (1, C, T) tiles
                    w_pre_ref, b_pre_ref,
                    w_in_ref, b_in_ref,              # per-layer streamed blocks
                    w_rs_ref, b_rs_ref,              # per-layer streamed blocks
                    w_m_ref, b_m_ref,
                    w_logs_ref, b_logs_ref,
                    z_ref, m_ref, logs_ref, mask_ref,
                    h_ref, skip_ref, hpad_ref, cat_ref,
                    *, hidden, kernel_size, dilation_rate, n_layers, pad_max):
    b = pl.program_id(0)
    l = pl.program_id(1)
    H = hidden
    K = kernel_size
    T = h_ref.shape[-1]
    half = (K - 1) // 2   # NOTE: matches torch "same" length only for odd K

    # ---- sequence mask: mask[0, t] = (t < x_lengths[b]) ----------------------
    t_idx = jax.lax.broadcasted_iota(jnp.int32, (1, T), 1)
    mask = (t_idx < lens_ref[b]).astype(jnp.float32)                  # (1, T)
    mask_h = jnp.broadcast_to(mask, (H, T))                           # hoisted once

    # ---- layer 0: pre 1x1 conv, init WN state, zero halo stripes -------------
    @pl.when(l == 0)
    def _():
        x_bf = x_ref[0].astype(jnp.bfloat16)                          # (C_in, T)
        h0 = jnp.dot(w_pre_ref[...], x_bf, preferred_element_type=jnp.float32)
        h_ref[...] = (h0 + b_pre_ref[...]) * mask_h                   # (H, T) f32
        skip_ref[...] = jnp.zeros_like(skip_ref)
        if pad_max > 0:
            # only the halo stripes; the middle is rewritten every layer
            hpad_ref[:, :pad_max] = jnp.zeros((H, pad_max), jnp.bfloat16)
            hpad_ref[:, pad_max + T:] = jnp.zeros((H, pad_max), jnp.bfloat16)

    # ---- WN layer l: fused K-tap dilated conv -> gated act -> res/skip -------
    # Stage current h (bf16) into the zero-halo padded scratch; every conv tap
    # is then a static lane-offset slice copied into the (K*H, T) cat scratch.
    hpad_ref[:, pad_max:pad_max + T] = h_ref[...].astype(jnp.bfloat16)
    for li in range(n_layers):                       # static dilation per layer
        d = dilation_rate ** li

        @pl.when(l == li)
        def _(d=d):
            for j in range(K):
                start = pad_max + (j - half) * d     # static, >= 0
                cat_ref[j * H:(j + 1) * H, :] = hpad_ref[:, start:start + T]

    # fused K-tap dilated conv: single (2H, K*H) @ (K*H, T) MXU matmul
    x_in = jnp.dot(w_in_ref[0], cat_ref[...],
                   preferred_element_type=jnp.float32) + b_in_ref[0]  # (2H, T) f32

    # fused_add_tanh_sigmoid_multiply with g = 0 (gin_channels == 0)
    acts = jnp.tanh(x_in[:H]) * jax.nn.sigmoid(x_in[H:])              # (H, T) f32
    acts_bf = acts.astype(jnp.bfloat16)

    @pl.when(l < n_layers - 1)
    def _():
        rs = jnp.dot(w_rs_ref[0], acts_bf,
                     preferred_element_type=jnp.float32) + b_rs_ref[0]  # (2H, T)
        h_ref[...] = (h_ref[...] + rs[:H]) * mask_h
        skip_ref[...] = skip_ref[...] + rs[H:]

    # ---- last layer: H-wide res_skip, proj 1x1 conv, reparameterise ----------
    @pl.when(l == n_layers - 1)
    def _():
        rs = jnp.dot(w_rs_ref[0, :H], acts_bf,
                     preferred_element_type=jnp.float32) + b_rs_ref[0, :H]
        out = skip_ref[...] + rs                     # masking deferred to proj
        out_bf = out.astype(jnp.bfloat16)
        m = (jnp.dot(w_m_ref[...], out_bf, preferred_element_type=jnp.float32)
             + b_m_ref[...]) * mask
        logs = (jnp.dot(w_logs_ref[...], out_bf, preferred_element_type=jnp.float32)
                + b_logs_ref[...]) * mask
        z = (m + noise_ref[0] * jnp.exp(logs)) * mask
        z_ref[0] = z
        m_ref[0] = m
        logs_ref[0] = logs
        mask_ref[0] = mask


def encoder_forward(x, x_lengths, noise, params, *, hidden, out_ch,
                    kernel_size, dilation_rate, n_layers):
    B, C_in, T_in = x.shape
    (w_pre, b_pre, w_in, b_in, w_rs, b_rs, w_proj, b_proj) = params
    K = kernel_size
    H = hidden
    pad_max = ((K - 1) * dilation_rate ** (n_layers - 1)) // 2

    # ---- lane-dense time axis: pad T to a multiple of 128 --------------------
    # Padded positions sit beyond x_lengths, get masked to zero inside the
    # kernel (identical to torch zero padding), and are sliced off below.
    T = ((T_in + 127) // 128) * 128
    if T != T_in:
        x = jnp.pad(x, ((0, 0), (0, 0), (0, T - T_in)))
        noise = jnp.pad(noise, ((0, 0), (0, 0), (0, T - T_in)))

    # ---- weight preprocessing (plain XLA, outside the kernel) ----------------
    # Fuse the K conv taps of each WN layer: (L, K, 2H, H) -> (L, 2H, K*H),
    # matching the cat_ref layout inside the kernel.
    w_in_f = jnp.transpose(w_in, (0, 2, 1, 3)).reshape(n_layers, 2 * H, K * H)
    # Split proj into m / logs halves to avoid a sublane-unaligned slice in-kernel.
    w_m, w_logs = w_proj[:out_ch], w_proj[out_ch:]
    b_m, b_logs = b_proj[:out_ch], b_proj[out_ch:]
    # Matmul operands in bf16 (native MXU dtype); biases / VPU math stay f32.
    bf = jnp.bfloat16
    w_pre_c = w_pre.astype(bf)
    w_in_c = w_in_f.astype(bf)
    w_rs_c = w_rs.astype(bf)
    w_m_c = w_m.astype(bf)
    w_logs_c = w_logs.astype(bf)

    def const_spec(a):
        nd = a.ndim
        return pl.BlockSpec(a.shape, lambda b_, l, lens, nd=nd: (0,) * nd)

    def layer_spec(a):
        # (n_layers, ...) stacked weight: stream one layer's slice per grid step.
        nd = a.ndim
        return pl.BlockSpec((1,) + a.shape[1:],
                            lambda b_, l, lens, nd=nd: (l,) + (0,) * (nd - 1))

    kernel = functools.partial(
        _encoder_kernel, hidden=H, kernel_size=K, dilation_rate=dilation_rate,
        n_layers=n_layers, pad_max=pad_max)

    grid_spec = pltpu.PrefetchScalarGridSpec(
        num_scalar_prefetch=1,                   # x_lengths -> SMEM
        grid=(B, n_layers),                      # layer axis last (sequential)
        in_specs=[
            pl.BlockSpec((1, C_in, T), lambda b_, l, lens: (b_, 0, 0)),     # x
            pl.BlockSpec((1, out_ch, T), lambda b_, l, lens: (b_, 0, 0)),   # noise
            const_spec(w_pre_c), const_spec(b_pre),
            layer_spec(w_in_c), layer_spec(b_in),
            layer_spec(w_rs_c), layer_spec(b_rs),
            const_spec(w_m_c), const_spec(b_m),
            const_spec(w_logs_c), const_spec(b_logs),
        ],
        out_specs=[
            pl.BlockSpec((1, out_ch, T), lambda b_, l, lens: (b_, 0, 0)),   # z
            pl.BlockSpec((1, out_ch, T), lambda b_, l, lens: (b_, 0, 0)),   # m
            pl.BlockSpec((1, out_ch, T), lambda b_, l, lens: (b_, 0, 0)),   # logs
            pl.BlockSpec((1, 1, T), lambda b_, l, lens: (b_, 0, 0)),        # x_mask
        ],
        scratch_shapes=[
            pltpu.VMEM((H, T), jnp.float32),                   # h (WN state)
            pltpu.VMEM((H, T), jnp.float32),                   # skip accumulator
            pltpu.VMEM((H, T + 2 * pad_max), jnp.bfloat16),    # zero-halo padded h
            pltpu.VMEM((K * H, T), jnp.bfloat16),              # fused conv taps
        ],
    )
    out_shape = (
        jax.ShapeDtypeStruct((B, out_ch, T), jnp.float32),
        jax.ShapeDtypeStruct((B, out_ch, T), jnp.float32),
        jax.ShapeDtypeStruct((B, out_ch, T), jnp.float32),
        jax.ShapeDtypeStruct((B, 1, T), jnp.float32),
    )
    z, m, logs, x_mask = pl.pallas_call(
        kernel,
        grid_spec=grid_spec,
        out_shape=out_shape,
        compiler_params=pltpu.CompilerParams(
            dimension_semantics=("parallel", "arbitrary"),
            vmem_limit_bytes=32 * 1024 * 1024),
    )(x_lengths.astype(jnp.int32), x, noise,
      w_pre_c, b_pre, w_in_c, b_in, w_rs_c, b_rs,
      w_m_c, b_m, w_logs_c, b_logs)

    if T != T_in:
        z, m, logs, x_mask = (z[..., :T_in], m[..., :T_in],
                              logs[..., :T_in], x_mask[..., :T_in])
    return z, m, logs, x_mask


def init_params(key, in_ch, out_ch, hidden, kernel_size, n_layers):
    # weight_norm at init has g = ||v||, i.e. effective weight == v, so plain
    # deterministically-initialised weights are equivalent.
    ks = jax.random.split(key, 8)
    s = 0.1
    w_pre = jax.random.normal(ks[0], (hidden, in_ch), jnp.float32) * s
    b_pre = jax.random.normal(ks[1], (hidden, 1), jnp.float32) * s
    # in_layers stacked as (n_layers, K, 2H, H): W[i, j] is the j-th conv tap
    # (== torch Conv1d weight[:, :, j]).
    w_in = jax.random.normal(ks[2], (n_layers, kernel_size, 2 * hidden, hidden),
                             jnp.float32) * s
    b_in = jax.random.normal(ks[3], (n_layers, 2 * hidden, 1), jnp.float32) * s
    # res_skip stacked as (n_layers, 2H, H); the last layer is Conv1d(H, H, 1)
    # whose (H, H) weights live in the first H rows — the bottom half of the
    # last layer's slot is never read by the kernel (no zero-padding contract).
    w_rs = jax.random.normal(ks[4], (n_layers, 2 * hidden, hidden), jnp.float32) * s
    b_rs = jax.random.normal(ks[5], (n_layers, 2 * hidden, 1), jnp.float32) * s
    w_proj = jax.random.normal(ks[6], (2 * out_ch, hidden), jnp.float32) * s
    b_proj = jax.random.normal(ks[7], (2 * out_ch, 1), jnp.float32) * s
    return (w_pre, b_pre, w_in, b_in, w_rs, b_rs, w_proj, b_proj)


if __name__ == "__main__":
    B, C_in, T = 2, 4, 16
    hidden, out_ch = 32, 4
    kernel_size, dilation_rate, n_layers = 5, 2, 4

    key = jax.random.PRNGKey(0)
    k_x, k_n, k_p = jax.random.split(key, 3)
    x = jax.random.normal(k_x, (B, C_in, T), jnp.float32)
    x_lengths = jnp.array([16, 11], jnp.int32)
    # torch.randn_like(m) equivalent, generated deterministically outside the kernel.
    noise = jax.random.normal(k_n, (B, out_ch, T), jnp.float32)
    params = init_params(k_p, C_in, out_ch, hidden, kernel_size, n_layers)

    z, m, logs, x_mask = encoder_forward(
        x, x_lengths, noise, params,
        hidden=hidden, out_ch=out_ch, kernel_size=kernel_size,
        dilation_rate=dilation_rate, n_layers=n_layers)
    jax.block_until_ready((z, m, logs, x_mask))
    print("KERNEL_OK")
</pallas_src>

<mosaic_0001>
module attributes {stable_mosaic.version = 11 : i64} {
  func.func @_encoder_kernel(%arg0: i32, %arg1: i32, %arg2: memref<2xi32, #tpu.memory_space<smem>>, %arg3: memref<1x4x128xf32, #tpu.memory_space<vmem>>, %arg4: memref<1x4x128xf32, #tpu.memory_space<vmem>>, %arg5: memref<32x4xbf16, #tpu.memory_space<vmem>>, %arg6: memref<32x1xf32, #tpu.memory_space<vmem>>, %arg7: memref<1x64x160xbf16, #tpu.memory_space<vmem>>, %arg8: memref<1x64x1xf32, #tpu.memory_space<vmem>>, %arg9: memref<1x64x32xbf16, #tpu.memory_space<vmem>>, %arg10: memref<1x64x1xf32, #tpu.memory_space<vmem>>, %arg11: memref<4x32xbf16, #tpu.memory_space<vmem>>, %arg12: memref<4x1xf32, #tpu.memory_space<vmem>>, %arg13: memref<4x32xbf16, #tpu.memory_space<vmem>>, %arg14: memref<4x1xf32, #tpu.memory_space<vmem>>, %arg15: memref<1x4x128xf32, #tpu.memory_space<vmem>>, %arg16: memref<1x4x128xf32, #tpu.memory_space<vmem>>, %arg17: memref<1x4x128xf32, #tpu.memory_space<vmem>>, %arg18: memref<1x1x128xf32, #tpu.memory_space<vmem>>, %arg19: memref<32x128xf32, #tpu.memory_space<vmem>>, %arg20: memref<32x128xf32, #tpu.memory_space<vmem>>, %arg21: memref<32x160xbf16, #tpu.memory_space<vmem>>, %arg22: memref<160x128xbf16, #tpu.memory_space<vmem>>) attributes {dimension_semantics = [#tpu.dimension_semantics<parallel>, #tpu.dimension_semantics<arbitrary>], iteration_bounds = array<i64: 2, 4>, scalar_prefetch = 1 : i64, scratch_operands = 4 : i64, tpu.core_type = #tpu.core_type<tc>, window_params = [{transform_indices = @transform_0, window_bounds = array<i64: 1, 4, 128>}, {transform_indices = @transform_1, window_bounds = array<i64: 1, 4, 128>}, {pipeline_mode = #tpu.pipeline_mode<synchronous>, transform_indices = @transform_2, window_bounds = array<i64: 32, 4>}, {pipeline_mode = #tpu.pipeline_mode<synchronous>, transform_indices = @transform_3, window_bounds = array<i64: 32, 1>}, {transform_indices = @transform_4, window_bounds = array<i64: 1, 64, 160>}, {transform_indices = @transform_5, window_bounds = array<i64: 1, 64, 1>}, {transform_indices = @transform_6, window_bounds = array<i64: 1, 64, 32>}, {transform_indices = @transform_7, window_bounds = array<i64: 1, 64, 1>}, {pipeline_mode = #tpu.pipeline_mode<synchronous>, transform_indices = @transform_8, window_bounds = array<i64: 4, 32>}, {pipeline_mode = #tpu.pipeline_mode<synchronous>, transform_indices = @transform_9, window_bounds = array<i64: 4, 1>}, {pipeline_mode = #tpu.pipeline_mode<synchronous>, transform_indices = @transform_10, window_bounds = array<i64: 4, 32>}, {pipeline_mode = #tpu.pipeline_mode<synchronous>, transform_indices = @transform_11, window_bounds = array<i64: 4, 1>}, {transform_indices = @transform_12, window_bounds = array<i64: 1, 4, 128>}, {transform_indices = @transform_13, window_bounds = array<i64: 1, 4, 128>}, {transform_indices = @transform_14, window_bounds = array<i64: 1, 4, 128>}, {transform_indices = @transform_15, window_bounds = array<i64: 1, 1, 128>}]} {
    %0 = tpu.iota {dimensions = array<i32: 1>} : vector<1x128xi32>
    %1 = arith.index_cast %arg0 : i32 to index
    %2 = memref.load %arg2[%1] : memref<2xi32, #tpu.memory_space<smem>>
    %3 = vector.broadcast %2 : i32 to vector<1x128xi32>
    %4 = arith.cmpi slt, %0, %3 : vector<1x128xi32>
    %5 = arith.extui %4 : vector<1x128xi1> to vector<1x128xi32>
    %6 = arith.sitofp %5 : vector<1x128xi32> to vector<1x128xf32>
    %7 = vector.shape_cast %6 : vector<1x128xf32> to vector<1x128xf32>
    %8 = vector.broadcast %7 : vector<1x128xf32> to vector<32x128xf32>
    %c0_i32 = arith.constant 0 : i32
    %9 = arith.cmpi eq, %arg1, %c0_i32 : i32
    %10 = arith.extui %9 : i1 to i32
    %c0_i32_0 = arith.constant 0 : i32
    %11 = arith.cmpi ne, %10, %c0_i32_0 : i32
    scf.if %11 {
      %c0_21 = arith.constant 0 : index
      %c0_22 = arith.constant 0 : index
      %c0_23 = arith.constant 0 : index
      %51 = vector.load %arg3[%c0_21, %c0_22, %c0_23] : memref<1x4x128xf32, #tpu.memory_space<vmem>>, vector<1x4x128xf32>
      %52 = vector.shape_cast %51 : vector<1x4x128xf32> to vector<4x128xf32>
      %53 = arith.truncf %52 : vector<4x128xf32> to vector<4x128xbf16>
      %c0_24 = arith.constant 0 : index
      %c0_25 = arith.constant 0 : index
      %54 = vector.load %arg5[%c0_24, %c0_25] : memref<32x4xbf16, #tpu.memory_space<vmem>>, vector<32x4xbf16>
      %cst_26 = arith.constant dense<0.000000e+00> : vector<32x128xf32>
      %55 = tpu.matmul %54, %53, %cst_26 {dimension_numbers = #tpu.dot_dimension_numbers<[1], [0], [0], [1], [0, 0, 1, 1], [], []>} : vector<32x4xbf16>, vector<4x128xbf16>, vector<32x128xf32> -> vector<32x128xf32>
      %c0_27 = arith.constant 0 : index
      %c0_28 = arith.constant 0 : index
      %56 = vector.load %arg6[%c0_27, %c0_28] : memref<32x1xf32, #tpu.memory_space<vmem>>, vector<32x1xf32>
      %57 = vector.broadcast %56 : vector<32x1xf32> to vector<32x128xf32>
      %58 = arith.addf %55, %57 : vector<32x128xf32>
      %59 = arith.mulf %58, %8 : vector<32x128xf32>
      %c0_29 = arith.constant 0 : index
      %c0_30 = arith.constant 0 : index
      %60 = vector.load %arg19[%c0_29, %c0_30] : memref<32x128xf32, #tpu.memory_space<vmem>>, vector<32x128xf32>
      tpu.vector_store %arg19[%c0_29, %c0_30], %59 {strides = array<i32>} : memref<32x128xf32, #tpu.memory_space<vmem>>, vector<32x128xf32>,
      %cst_31 = arith.constant 0.000000e+00 : f32
      %61 = vector.broadcast %cst_31 : f32 to vector<32x128xf32>
      %c0_32 = arith.constant 0 : index
      %c0_33 = arith.constant 0 : index
      %62 = vector.load %arg20[%c0_32, %c0_33] : memref<32x128xf32, #tpu.memory_space<vmem>>, vector<32x128xf32>
      tpu.vector_store %arg20[%c0_32, %c0_33], %61 {strides = array<i32>} : memref<32x128xf32, #tpu.memory_space<vmem>>, vector<32x128xf32>,
      %cst_34 = arith.constant 0.000000e+00 : bf16
      %63 = vector.broadcast %cst_34 : bf16 to vector<32x16xbf16>
      %c0_35 = arith.constant 0 : index
      %c0_36 = arith.constant 0 : index
      %64 = vector.load %arg21[%c0_35, %c0_36] : memref<32x160xbf16, #tpu.memory_space<vmem>>, vector<32x16xbf16>
      tpu.vector_store %arg21[%c0_35, %c0_36], %63 {strides = array<i32>} : memref<32x160xbf16, #tpu.memory_space<vmem>>, vector<32x16xbf16>,
      %cst_37 = arith.constant 0.000000e+00 : bf16
      %65 = vector.broadcast %cst_37 : bf16 to vector<32x16xbf16>
      %c0_38 = arith.constant 0 : index
      %c144 = arith.constant 144 : index
      %66 = vector.load %arg21[%c0_38, %c144] : memref<32x160xbf16, #tpu.memory_space<vmem>>, vector<32x16xbf16>
      tpu.vector_store %arg21[%c0_38, %c144], %65 {strides = array<i32>} : memref<32x160xbf16, #tpu.memory_space<vmem>>, vector<32x16xbf16>,
    } else {
    }
    %c0 = arith.constant 0 : index
    %c0_1 = arith.constant 0 : index
    %12 = vector.load %arg19[%c0, %c0_1] : memref<32x128xf32, #tpu.memory_space<vmem>>, vector<32x128xf32>
    %13 = arith.truncf %12 : vector<32x128xf32> to vector<32x128xbf16>
    %c0_2 = arith.constant 0 : index
    %c16 = arith.constant 16 : index
    %14 = vector.load %arg21[%c0_2, %c16] : memref<32x160xbf16, #tpu.memory_space<vmem>>, vector<32x128xbf16>
    tpu.vector_store %arg21[%c0_2, %c16], %13 {strides = array<i32>} : memref<32x160xbf16, #tpu.memory_space<vmem>>, vector<32x128xbf16>,
    %c0_i32_3 = arith.constant 0 : i32
    %15 = arith.cmpi eq, %arg1, %c0_i32_3 : i32
    %16 = arith.extui %15 : i1 to i32
    %c0_i32_4 = arith.constant 0 : i32
    %17 = arith.cmpi ne, %16, %c0_i32_4 : i32
    scf.if %17 {
      %c0_21 = arith.constant 0 : index
      %c14 = arith.constant 14 : index
      %51 = vector.load %arg21[%c0_21, %c14] : memref<32x160xbf16, #tpu.memory_space<vmem>>, vector<32x128xbf16>
      %c0_22 = arith.constant 0 : index
      %c0_23 = arith.constant 0 : index
      %52 = vector.load %arg22[%c0_22, %c0_23] : memref<160x128xbf16, #tpu.memory_space<vmem>>, vector<32x128xbf16>
      tpu.vector_store %arg22[%c0_22, %c0_23], %51 {strides = array<i32>} : memref<160x128xbf16, #tpu.memory_space<vmem>>, vector<32x128xbf16>,
      %c0_24 = arith.constant 0 : index
      %c15 = arith.constant 15 : index
      %53 = vector.load %arg21[%c0_24, %c15] : memref<32x160xbf16, #tpu.memory_space<vmem>>, vector<32x128xbf16>
      %c32 = arith.constant 32 : index
      %c0_25 = arith.constant 0 : index
      %54 = vector.load %arg22[%c32, %c0_25] : memref<160x128xbf16, #tpu.memory_space<vmem>>, vector<32x128xbf16>
      tpu.vector_store %arg22[%c32, %c0_25], %53 {strides = array<i32>} : memref<160x128xbf16, #tpu.memory_space<vmem>>, vector<32x128xbf16>,
      %c0_26 = arith.constant 0 : index
      %c16_27 = arith.constant 16 : index
      %55 = vector.load %arg21[%c0_26, %c16_27] : memref<32x160xbf16, #tpu.memory_space<vmem>>, vector<32x128xbf16>
      %c64 = arith.constant 64 : index
      %c0_28 = arith.constant 0 : index
      %56 = vector.load %arg22[%c64, %c0_28] : memref<160x128xbf16, #tpu.memory_space<vmem>>, vector<32x128xbf16>
      tpu.vector_store %arg22[%c64, %c0_28], %55 {strides = array<i32>} : memref<160x128xbf16, #tpu.memory_space<vmem>>, vector<32x128xbf16>,
      %c0_29 = arith.constant 0 : index
      %c17 = arith.constant 17 : index
      %57 = vector.load %arg21[%c0_29, %c17] : memref<32x160xbf16, #tpu.memory_space<vmem>>, vector<32x128xbf16>
      %c96 = arith.constant 96 : index
      %c0_30 = arith.constant 0 : index
      %58 = vector.load %arg22[%c96, %c0_30] : memref<160x128xbf16, #tpu.memory_space<vmem>>, vector<32x128xbf16>
      tpu.vector_store %arg22[%c96, %c0_30], %57 {strides = array<i32>} : memref<160x128xbf16, #tpu.memory_space<vmem>>, vector<32x128xbf16>,
      %c0_31 = arith.constant 0 : index
      %c18 = arith.constant 18 : index
      %59 = vector.load %arg21[%c0_31, %c18] : memref<32x160xbf16, #tpu.memory_space<vmem>>, vector<32x128xbf16>
      %c128 = arith.constant 128 : index
      %c0_32 = arith.constant 0 : index
      %60 = vector.load %arg22[%c128, %c0_32] : memref<160x128xbf16, #tpu.memory_space<vmem>>, vector<32x128xbf16>
      tpu.vector_store %arg22[%c128, %c0_32], %59 {strides = array<i32>} : memref<160x128xbf16, #tpu.memory_space<vmem>>, vector<32x128xbf16>,
    } else {
    }
    %c1_i32 = arith.constant 1 : i32
    %18 = arith.cmpi eq, %arg1, %c1_i32 : i32
    %19 = arith.extui %18 : i1 to i32
    %c0_i32_5 = arith.constant 0 : i32
    %20 = arith.cmpi ne, %19, %c0_i32_5 : i32
    scf.if %20 {
      %c0_21 = arith.constant 0 : index
      %c12 = arith.constant 12 : index
      %51 = vector.load %arg21[%c0_21, %c12] : memref<32x160xbf16, #tpu.memory_space<vmem>>, vector<32x128xbf16>
      %c0_22 = arith.constant 0 : index
      %c0_23 = arith.constant 0 : index
      %52 = vector.load %arg22[%c0_22, %c0_23] : memref<160x128xbf16, #tpu.memory_space<vmem>>, vector<32x128xbf16>
      tpu.vector_store %arg22[%c0_22, %c0_23], %51 {strides = array<i32>} : memref<160x128xbf16, #tpu.memory_space<vmem>>, vector<32x128xbf16>,
      %c0_24 = arith.constant 0 : index
      %c14 = arith.constant 14 : index
      %53 = vector.load %arg21[%c0_24, %c14] : memref<32x160xbf16, #tpu.memory_space<vmem>>, vector<32x128xbf16>
      %c32 = arith.constant 32 : index
      %c0_25 = arith.constant 0 : index
      %54 = vector.load %arg22[%c32, %c0_25] : memref<160x128xbf16, #tpu.memory_space<vmem>>, vector<32x128xbf16>
      tpu.vector_store %arg22[%c32, %c0_25], %53 {strides = array<i32>} : memref<160x128xbf16, #tpu.memory_space<vmem>>, vector<32x128xbf16>,
      %c0_26 = arith.constant 0 : index
      %c16_27 = arith.constant 16 : index
      %55 = vector.load %arg21[%c0_26, %c16_27] : memref<32x160xbf16, #tpu.memory_space<vmem>>, vector<32x128xbf16>
      %c64 = arith.constant 64 : index
      %c0_28 = arith.constant 0 : index
      %56 = vector.load %arg22[%c64, %c0_28] : memref<160x128xbf16, #tpu.memory_space<vmem>>, vector<32x128xbf16>
      tpu.vector_store %arg22[%c64, %c0_28], %55 {strides = array<i32>} : memref<160x128xbf16, #tpu.memory_space<vmem>>, vector<32x128xbf16>,
      %c0_29 = arith.constant 0 : index
      %c18 = arith.constant 18 : index
      %57 = vector.load %arg21[%c0_29, %c18] : memref<32x160xbf16, #tpu.memory_space<vmem>>, vector<32x128xbf16>
      %c96 = arith.constant 96 : index
      %c0_30 = arith.constant 0 : index
      %58 = vector.load %arg22[%c96, %c0_30] : memref<160x128xbf16, #tpu.memory_space<vmem>>, vector<32x128xbf16>
      tpu.vector_store %arg22[%c96, %c0_30], %57 {strides = array<i32>} : memref<160x128xbf16, #tpu.memory_space<vmem>>, vector<32x128xbf16>,
      %c0_31 = arith.constant 0 : index
      %c20 = arith.constant 20 : index
      %59 = vector.load %arg21[%c0_31, %c20] : memref<32x160xbf16, #tpu.memory_space<vmem>>, vector<32x128xbf16>
      %c128 = arith.constant 128 : index
      %c0_32 = arith.constant 0 : index
      %60 = vector.load %arg22[%c128, %c0_32] : memref<160x128xbf16, #tpu.memory_space<vmem>>, vector<32x128xbf16>
      tpu.vector_store %arg22[%c128, %c0_32], %59 {strides = array<i32>} : memref<160x128xbf16, #tpu.memory_space<vmem>>, vector<32x128xbf16>,
    } else {
    }
    %c2_i32 = arith.constant 2 : i32
    %21 = arith.cmpi eq, %arg1, %c2_i32 : i32
    %22 = arith.extui %21 : i1 to i32
    %c0_i32_6 = arith.constant 0 : i32
    %23 = arith.cmpi ne, %22, %c0_i32_6 : i32
    scf.if %23 {
      %c0_21 = arith.constant 0 : index
      %c8 = arith.constant 8 : index
      %51 = vector.load %arg21[%c0_21, %c8] : memref<32x160xbf16, #tpu.memory_space<vmem>>, vector<32x128xbf16>
      %c0_22 = arith.constant 0 : index
      %c0_23 = arith.constant 0 : index
      %52 = vector.load %arg22[%c0_22, %c0_23] : memref<160x128xbf16, #tpu.memory_space<vmem>>, vector<32x128xbf16>
      tpu.vector_store %arg22[%c0_22, %c0_23], %51 {strides = array<i32>} : memref<160x128xbf16, #tpu.memory_space<vmem>>, vector<32x128xbf16>,
      %c0_24 = arith.constant 0 : index
      %c12 = arith.constant 12 : index
      %53 = vector.load %arg21[%c0_24, %c12] : memref<32x160xbf16, #tpu.memory_space<vmem>>, vector<32x128xbf16>
      %c32 = arith.constant 32 : index
      %c0_25 = arith.constant 0 : index
      %54 = vector.load %arg22[%c32, %c0_25] : memref<160x128xbf16, #tpu.memory_space<vmem>>, vector<32x128xbf16>
      tpu.vector_store %arg22[%c32, %c0_25], %53 {strides = array<i32>} : memref<160x128xbf16, #tpu.memory_space<vmem>>, vector<32x128xbf16>,
      %c0_26 = arith.constant 0 : index
      %c16_27 = arith.constant 16 : index
      %55 = vector.load %arg21[%c0_26, %c16_27] : memref<32x160xbf16, #tpu.memory_space<vmem>>, vector<32x128xbf16>
      %c64 = arith.constant 64 : index
      %c0_28 = arith.constant 0 : index
      %56 = vector.load %arg22[%c64, %c0_28] : memref<160x128xbf16, #tpu.memory_space<vmem>>, vector<32x128xbf16>
      tpu.vector_store %arg22[%c64, %c0_28], %55 {strides = array<i32>} : memref<160x128xbf16, #tpu.memory_space<vmem>>, vector<32x128xbf16>,
      %c0_29 = arith.constant 0 : index
      %c20 = arith.constant 20 : index
      %57 = vector.load %arg21[%c0_29, %c20] : memref<32x160xbf16, #tpu.memory_space<vmem>>, vector<32x128xbf16>
      %c96 = arith.constant 96 : index
      %c0_30 = arith.constant 0 : index
      %58 = vector.load %arg22[%c96, %c0_30] : memref<160x128xbf16, #tpu.memory_space<vmem>>, vector<32x128xbf16>
      tpu.vector_store %arg22[%c96, %c0_30], %57 {strides = array<i32>} : memref<160x128xbf16, #tpu.memory_space<vmem>>, vector<32x128xbf16>,
      %c0_31 = arith.constant 0 : index
      %c24 = arith.constant 24 : index
      %59 = vector.load %arg21[%c0_31, %c24] : memref<32x160xbf16, #tpu.memory_space<vmem>>, vector<32x128xbf16>
      %c128 = arith.constant 128 : index
      %c0_32 = arith.constant 0 : index
      %60 = vector.load %arg22[%c128, %c0_32] : memref<160x128xbf16, #tpu.memory_space<vmem>>, vector<32x128xbf16>
      tpu.vector_store %arg22[%c128, %c0_32], %59 {strides = array<i32>} : memref<160x128xbf16, #tpu.memory_space<vmem>>, vector<32x128xbf16>,
    } else {
    }
    %c3_i32 = arith.constant 3 : i32
    %24 = arith.cmpi eq, %arg1, %c3_i32 : i32
    %25 = arith.extui %24 : i1 to i32
    %c0_i32_7 = arith.constant 0 : i32
    %26 = arith.cmpi ne, %25, %c0_i32_7 : i32
    scf.if %26 {
      %c0_21 = arith.constant 0 : index
      %c0_22 = arith.constant 0 : index
      %51 = vector.load %arg21[%c0_21, %c0_22] : memref<32x160xbf16, #tpu.memory_space<vmem>>, vector<32x128xbf16>
      %c0_23 = arith.constant 0 : index
      %c0_24 = arith.constant 0 : index
      %52 = vector.load %arg22[%c0_23, %c0_24] : memref<160x128xbf16, #tpu.memory_space<vmem>>, vector<32x128xbf16>
      tpu.vector_store %arg22[%c0_23, %c0_24], %51 {strides = array<i32>} : memref<160x128xbf16, #tpu.memory_space<vmem>>, vector<32x128xbf16>,
      %c0_25 = arith.constant 0 : index
      %c8 = arith.constant 8 : index
      %53 = vector.load %arg21[%c0_25, %c8] : memref<32x160xbf16, #tpu.memory_space<vmem>>, vector<32x128xbf16>
      %c32 = arith.constant 32 : index
      %c0_26 = arith.constant 0 : index
      %54 = vector.load %arg22[%c32, %c0_26] : memref<160x128xbf16, #tpu.memory_space<vmem>>, vector<32x128xbf16>
      tpu.vector_store %arg22[%c32, %c0_26], %53 {strides = array<i32>} : memref<160x128xbf16, #tpu.memory_space<vmem>>, vector<32x128xbf16>,
      %c0_27 = arith.constant 0 : index
      %c16_28 = arith.constant 16 : index
      %55 = vector.load %arg21[%c0_27, %c16_28] : memref<32x160xbf16, #tpu.memory_space<vmem>>, vector<32x128xbf16>
      %c64 = arith.constant 64 : index
      %c0_29 = arith.constant 0 : index
      %56 = vector.load %arg22[%c64, %c0_29] : memref<160x128xbf16, #tpu.memory_space<vmem>>, vector<32x128xbf16>
      tpu.vector_store %arg22[%c64, %c0_29], %55 {strides = array<i32>} : memref<160x128xbf16, #tpu.memory_space<vmem>>, vector<32x128xbf16>,
      %c0_30 = arith.constant 0 : index
      %c24 = arith.constant 24 : index
      %57 = vector.load %arg21[%c0_30, %c24] : memref<32x160xbf16, #tpu.memory_space<vmem>>, vector<32x128xbf16>
      %c96 = arith.constant 96 : index
      %c0_31 = arith.constant 0 : index
      %58 = vector.load %arg22[%c96, %c0_31] : memref<160x128xbf16, #tpu.memory_space<vmem>>, vector<32x128xbf16>
      tpu.vector_store %arg22[%c96, %c0_31], %57 {strides = array<i32>} : memref<160x128xbf16, #tpu.memory_space<vmem>>, vector<32x128xbf16>,
      %c0_32 = arith.constant 0 : index
      %c32_33 = arith.constant 32 : index
      %59 = vector.load %arg21[%c0_32, %c32_33] : memref<32x160xbf16, #tpu.memory_space<vmem>>, vector<32x128xbf16>
      %c128 = arith.constant 128 : index
      %c0_34 = arith.constant 0 : index
      %60 = vector.load %arg22[%c128, %c0_34] : memref<160x128xbf16, #tpu.memory_space<vmem>>, vector<32x128xbf16>
      tpu.vector_store %arg22[%c128, %c0_34], %59 {strides = array<i32>} : memref<160x128xbf16, #tpu.memory_space<vmem>>, vector<32x128xbf16>,
    } else {
    }
    %c0_8 = arith.constant 0 : index
    %c0_9 = arith.constant 0 : index
    %c0_10 = arith.constant 0 : index
    %27 = vector.load %arg7[%c0_8, %c0_9, %c0_10] : memref<1x64x160xbf16, #tpu.memory_space<vmem>>, vector<1x64x160xbf16>
    %28 = vector.shape_cast %27 : vector<1x64x160xbf16> to vector<64x160xbf16>
    %c0_11 = arith.constant 0 : index
    %c0_12 = arith.constant 0 : index
    %29 = vector.load %arg22[%c0_11, %c0_12] : memref<160x128xbf16, #tpu.memory_space<vmem>>, vector<160x128xbf16>
    %cst = arith.constant dense<0.000000e+00> : vector<64x128xf32>
    %30 = tpu.matmul %28, %29, %cst {dimension_numbers = #tpu.dot_dimension_numbers<[1], [0], [0], [1], [0, 0, 1, 1], [], []>} : vector<64x160xbf16>, vector<160x128xbf16>, vector<64x128xf32> -> vector<64x128xf32>
    %c0_13 = arith.constant 0 : index
    %c0_14 = arith.constant 0 : index
    %c0_15 = arith.constant 0 : index
    %31 = vector.load %arg8[%c0_13, %c0_14, %c0_15] : memref<1x64x1xf32, #tpu.memory_space<vmem>>, vector<1x64x1xf32>
    %32 = vector.shape_cast %31 : vector<1x64x1xf32> to vector<64x1xf32>
    %33 = vector.broadcast %32 : vector<64x1xf32> to vector<64x128xf32>
    %34 = arith.addf %30, %33 : vector<64x128xf32>
    %35 = vector.extract_strided_slice %34 {offsets = [0, 0], sizes = [32, 128], strides = [1, 1]} : vector<64x128xf32> to vector<32x128xf32>
    %36 = math.tanh %35 : vector<32x128xf32>
    %37 = vector.extract_strided_slice %34 {offsets = [32, 0], sizes = [32, 128], strides = [1, 1]} : vector<64x128xf32> to vector<32x128xf32>
    %38 = arith.negf %37 : vector<32x128xf32>
    %39 = math.exp %38 : vector<32x128xf32>
    %cst_16 = arith.constant 1.000000e+00 : f32
    %40 = vector.broadcast %cst_16 : f32 to vector<32x128xf32>
    %41 = arith.addf %40, %39 : vector<32x128xf32>
    %42 = arith.divf %40, %41 : vector<32x128xf32>
    %43 = arith.mulf %36, %42 : vector<32x128xf32>
    %44 = arith.truncf %43 : vector<32x128xf32> to vector<32x128xbf16>
    %c3_i32_17 = arith.constant 3 : i32
    %45 = arith.cmpi slt, %arg1, %c3_i32_17 : i32
    %46 = arith.extui %45 : i1 to i32
    %c0_i32_18 = arith.constant 0 : i32
    %47 = arith.cmpi ne, %46, %c0_i32_18 : i32
    scf.if %47 {
      %c0_21 = arith.constant 0 : index
      %c0_22 = arith.constant 0 : index
      %c0_23 = arith.constant 0 : index
      %51 = vector.load %arg9[%c0_21, %c0_22, %c0_23] : memref<1x64x32xbf16, #tpu.memory_space<vmem>>, vector<1x64x32xbf16>
      %52 = vector.shape_cast %51 : vector<1x64x32xbf16> to vector<64x32xbf16>
      %cst_24 = arith.constant dense<0.000000e+00> : vector<64x128xf32>
      %53 = tpu.matmul %52, %44, %cst_24 {dimension_numbers = #tpu.dot_dimension_numbers<[1], [0], [0], [1], [0, 0, 1, 1], [], []>} : vector<64x32xbf16>, vector<32x128xbf16>, vector<64x128xf32> -> vector<64x128xf32>
      %c0_25 = arith.constant 0 : index
      %c0_26 = arith.constant 0 : index
      %c0_27 = arith.constant 0 : index
      %54 = vector.load %arg10[%c0_25, %c0_26, %c0_27] : memref<1x64x1xf32, #tpu.memory_space<vmem>>, vector<1x64x1xf32>
      %55 = vector.shape_cast %54 : vector<1x64x1xf32> to vector<64x1xf32>
      %56 = vector.broadcast %55 : vector<64x1xf32> to vector<64x128xf32>
      %57 = arith.addf %53, %56 : vector<64x128xf32>
      %c0_28 = arith.constant 0 : index
      %c0_29 = arith.constant 0 : index
      %58 = vector.load %arg19[%c0_28, %c0_29] : memref<32x128xf32, #tpu.memory_space<vmem>>, vector<32x128xf32>
      %59 = vector.extract_strided_slice %57 {offsets = [0, 0], sizes = [32, 128], strides = [1, 1]} : vector<64x128xf32> to vector<32x128xf32>
      %60 = arith.addf %58, %59 : vector<32x128xf32>
      %61 = arith.mulf %60, %8 : vector<32x128xf32>
      %c0_30 = arith.constant 0 : index
      %c0_31 = arith.constant 0 : index
      %62 = vector.load %arg19[%c0_30, %c0_31] : memref<32x128xf32, #tpu.memory_space<vmem>>, vector<32x128xf32>
      tpu.vector_store %arg19[%c0_30, %c0_31], %61 {strides = array<i32>} : memref<32x128xf32, #tpu.memory_space<vmem>>, vector<32x128xf32>,
      %c0_32 = arith.constant 0 : index
      %c0_33 = arith.constant 0 : index
      %63 = vector.load %arg20[%c0_32, %c0_33] : memref<32x128xf32, #tpu.memory_space<vmem>>, vector<32x128xf32>
      %64 = vector.extract_strided_slice %57 {offsets = [32, 0], sizes = [32, 128], strides = [1, 1]} : vector<64x128xf32> to vector<32x128xf32>
      %65 = arith.addf %63, %64 : vector<32x128xf32>
      %c0_34 = arith.constant 0 : index
      %c0_35 = arith.constant 0 : index
      %66 = vector.load %arg20[%c0_34, %c0_35] : memref<32x128xf32, #tpu.memory_space<vmem>>, vector<32x128xf32>
      tpu.vector_store %arg20[%c0_34, %c0_35], %65 {strides = array<i32>} : memref<32x128xf32, #tpu.memory_space<vmem>>, vector<32x128xf32>,
    } else {
    }
    %c3_i32_19 = arith.constant 3 : i32
    %48 = arith.cmpi eq, %arg1, %c3_i32_19 : i32
    %49 = arith.extui %48 : i1 to i32
    %c0_i32_20 = arith.constant 0 : i32
    %50 = arith.cmpi ne, %49, %c0_i32_20 : i32
    scf.if %50 {
      %c0_21 = arith.constant 0 : index
      %c0_22 = arith.constant 0 : index
      %c0_23 = arith.constant 0 : index
      %51 = vector.load %arg9[%c0_21, %c0_22, %c0_23] : memref<1x64x32xbf16, #tpu.memory_space<vmem>>, vector<1x32x32xbf16>
      %52 = vector.shape_cast %51 : vector<1x32x32xbf16> to vector<32x32xbf16>
      %cst_24 = arith.constant dense<0.000000e+00> : vector<32x128xf32>
      %53 = tpu.matmul %52, %44, %cst_24 {dimension_numbers = #tpu.dot_dimension_numbers<[1], [0], [0], [1], [0, 0, 1, 1], [], []>} : vector<32x32xbf16>, vector<32x128xbf16>, vector<32x128xf32> -> vector<32x128xf32>
      %c0_25 = arith.constant 0 : index
      %c0_26 = arith.constant 0 : index
      %c0_27 = arith.constant 0 : index
      %54 = vector.load %arg10[%c0_25, %c0_26, %c0_27] : memref<1x64x1xf32, #tpu.memory_space<vmem>>, vector<1x32x1xf32>
      %55 = vector.shape_cast %54 : vector<1x32x1xf32> to vector<32x1xf32>
      %56 = vector.broadcast %55 : vector<32x1xf32> to vector<32x128xf32>
      %57 = arith.addf %53, %56 : vector<32x128xf32>
      %c0_28 = arith.constant 0 : index
      %c0_29 = arith.constant 0 : index
      %58 = vector.load %arg20[%c0_28, %c0_29] : memref<32x128xf32, #tpu.memory_space<vmem>>, vector<32x128xf32>
      %59 = arith.addf %58, %57 : vector<32x128xf32>
      %60 = arith.truncf %59 : vector<32x128xf32> to vector<32x128xbf16>
      %c0_30 = arith.constant 0 : index
      %c0_31 = arith.constant 0 : index
      %61 = vector.load %arg11[%c0_30, %c0_31] : memref<4x32xbf16, #tpu.memory_space<vmem>>, vector<4x32xbf16>
      %cst_32 = arith.constant dense<0.000000e+00> : vector<4x128xf32>
      %62 = tpu.matmul %61, %60, %cst_32 {dimension_numbers = #tpu.dot_dimension_numbers<[1], [0], [0], [1], [0, 0, 1, 1], [], []>} : vector<4x32xbf16>, vector<32x128xbf16>, vector<4x128xf32> -> vector<4x128xf32>
      %c0_33 = arith.constant 0 : index
      %c0_34 = arith.constant 0 : index
      %63 = vector.load %arg12[%c0_33, %c0_34] : memref<4x1xf32, #tpu.memory_space<vmem>>, vector<4x1xf32>
      %64 = vector.broadcast %63 : vector<4x1xf32> to vector<4x128xf32>
      %65 = arith.addf %62, %64 : vector<4x128xf32>
      %66 = vector.broadcast %6 : vector<1x128xf32> to vector<4x128xf32>
      %67 = arith.mulf %65, %66 : vector<4x128xf32>
      %c0_35 = arith.constant 0 : index
      %c0_36 = arith.constant 0 : index
      %68 = vector.load %arg13[%c0_35, %c0_36] : memref<4x32xbf16, #tpu.memory_space<vmem>>, vector<4x32xbf16>
      %cst_37 = arith.constant dense<0.000000e+00> : vector<4x128xf32>
      %69 = tpu.matmul %68, %60, %cst_37 {dimension_numbers = #tpu.dot_dimension_numbers<[1], [0], [0], [1], [0, 0, 1, 1], [], []>} : vector<4x32xbf16>, vector<32x128xbf16>, vector<4x128xf32> -> vector<4x128xf32>
      %c0_38 = arith.constant 0 : index
      %c0_39 = arith.constant 0 : index
      %70 = vector.load %arg14[%c0_38, %c0_39] : memref<4x1xf32, #tpu.memory_space<vmem>>, vector<4x1xf32>
      %71 = vector.broadcast %70 : vector<4x1xf32> to vector<4x128xf32>
      %72 = arith.addf %69, %71 : vector<4x128xf32>
      %73 = vector.broadcast %6 : vector<1x128xf32> to vector<4x128xf32>
      %74 = arith.mulf %72, %73 : vector<4x128xf32>
      %c0_40 = arith.constant 0 : index
      %c0_41 = arith.constant 0 : index
      %c0_42 = arith.constant 0 : index
      %75 = vector.load %arg4[%c0_40, %c0_41, %c0_42] : memref<1x4x128xf32, #tpu.memory_space<vmem>>, vector<1x4x128xf32>
      %76 = vector.shape_cast %75 : vector<1x4x128xf32> to vector<4x128xf32>
      %77 = math.exp %74 : vector<4x128xf32>
      %78 = arith.mulf %76, %77 : vector<4x128xf32>
      %79 = arith.addf %67, %78 : vector<4x128xf32>
      %80 = vector.broadcast %6 : vector<1x128xf32> to vector<4x128xf32>
      %81 = arith.mulf %79, %80 : vector<4x128xf32>
      %c0_43 = arith.constant 0 : index
      %c0_44 = arith.constant 0 : index
      %c0_45 = arith.constant 0 : index
      %82 = vector.load %arg15[%c0_43, %c0_44, %c0_45] : memref<1x4x128xf32, #tpu.memory_space<vmem>>, vector<1x4x128xf32>
      %83 = vector.shape_cast %82 : vector<1x4x128xf32> to vector<4x128xf32>
      %84 = vector.shape_cast %81 : vector<4x128xf32> to vector<1x4x128xf32>
      tpu.vector_store %arg15[%c0_43, %c0_44, %c0_45], %84 {strides = array<i32>} : memref<1x4x128xf32, #tpu.memory_space<vmem>>, vector<1x4x128xf32>,
      %c0_46 = arith.constant 0 : index
      %c0_47 = arith.constant 0 : index
      %c0_48 = arith.constant 0 : index
      %85 = vector.load %arg16[%c0_46, %c0_47, %c0_48] : memref<1x4x128xf32, #tpu.memory_space<vmem>>, vector<1x4x128xf32>
      %86 = vector.shape_cast %85 : vector<1x4x128xf32> to vector<4x128xf32>
      %87 = vector.shape_cast %67 : vector<4x128xf32> to vector<1x4x128xf32>
      tpu.vector_store %arg16[%c0_46, %c0_47, %c0_48], %87 {strides = array<i32>} : memref<1x4x128xf32, #tpu.memory_space<vmem>>, vector<1x4x128xf32>,
      %c0_49 = arith.constant 0 : index
      %c0_50 = arith.constant 0 : index
      %c0_51 = arith.constant 0 : index
      %88 = vector.load %arg17[%c0_49, %c0_50, %c0_51] : memref<1x4x128xf32, #tpu.memory_space<vmem>>, vector<1x4x128xf32>
      %89 = vector.shape_cast %88 : vector<1x4x128xf32> to vector<4x128xf32>
      %90 = vector.shape_cast %74 : vector<4x128xf32> to vector<1x4x128xf32>
      tpu.vector_store %arg17[%c0_49, %c0_50, %c0_51], %90 {strides = array<i32>} : memref<1x4x128xf32, #tpu.memory_space<vmem>>, vector<1x4x128xf32>,
      %c0_52 = arith.constant 0 : index
      %c0_53 = arith.constant 0 : index
      %c0_54 = arith.constant 0 : index
      %91 = vector.load %arg18[%c0_52, %c0_53, %c0_54] : memref<1x1x128xf32, #tpu.memory_space<vmem>>, vector<1x1x128xf32>
      %92 = vector.shape_cast %91 : vector<1x1x128xf32> to vector<1x128xf32>
      %93 = vector.shape_cast %6 : vector<1x128xf32> to vector<1x1x128xf32>
      tpu.vector_store %arg18[%c0_52, %c0_53, %c0_54], %93 {strides = array<i32>} : memref<1x1x128xf32, #tpu.memory_space<vmem>>, vector<1x1x128xf32>,
    } else {
    }
    return
  }
  func.func @transform_0(%arg0: i32, %arg1: i32, %arg2: memref<2xi32, #tpu.memory_space<smem>>) -> (i32, i32, i32) {
    %c0_i32 = arith.constant 0 : i32
    %c0_i32_0 = arith.constant 0 : i32
    %c0_i32_1 = arith.constant 0 : i32
    return %arg0, %c0_i32, %c0_i32_0 : i32, i32, i32
  }
  func.func @transform_1(%arg0: i32, %arg1: i32, %arg2: memref<2xi32, #tpu.memory_space<smem>>) -> (i32, i32, i32) {
    %c0_i32 = arith.constant 0 : i32
    %c0_i32_0 = arith.constant 0 : i32
    %c0_i32_1 = arith.constant 0 : i32
    return %arg0, %c0_i32, %c0_i32_0 : i32, i32, i32
  }
  func.func @transform_2(%arg0: i32, %arg1: i32, %arg2: memref<2xi32, #tpu.memory_space<smem>>) -> (i32, i32) {
    %c0_i32 = arith.constant 0 : i32
    %c0_i32_0 = arith.constant 0 : i32
    %c0_i32_1 = arith.constant 0 : i32
    return %c0_i32, %c0_i32_0 : i32, i32
  }
  func.func @transform_3(%arg0: i32, %arg1: i32, %arg2: memref<2xi32, #tpu.memory_space<smem>>) -> (i32, i32) {
    %c0_i32 = arith.constant 0 : i32
    %c0_i32_0 = arith.constant 0 : i32
    %c0_i32_1 = arith.constant 0 : i32
    return %c0_i32, %c0_i32_0 : i32, i32
  }
  func.func @transform_4(%arg0: i32, %arg1: i32, %arg2: memref<2xi32, #tpu.memory_space<smem>>) -> (i32, i32, i32) {
    %c0_i32 = arith.constant 0 : i32
    %c0_i32_0 = arith.constant 0 : i32
    %c0_i32_1 = arith.constant 0 : i32
    return %arg1, %c0_i32, %c0_i32_0 : i32, i32, i32
  }
  func.func @transform_5(%arg0: i32, %arg1: i32, %arg2: memref<2xi32, #tpu.memory_space<smem>>) -> (i32, i32, i32) {
    %c0_i32 = arith.constant 0 : i32
    %c0_i32_0 = arith.constant 0 : i32
    %c0_i32_1 = arith.constant 0 : i32
    return %arg1, %c0_i32, %c0_i32_0 : i32, i32, i32
  }
  func.func @transform_6(%arg0: i32, %arg1: i32, %arg2: memref<2xi32, #tpu.memory_space<smem>>) -> (i32, i32, i32) {
    %c0_i32 = arith.constant 0 : i32
    %c0_i32_0 = arith.constant 0 : i32
    %c0_i32_1 = arith.constant 0 : i32
    return %arg1, %c0_i32, %c0_i32_0 : i32, i32, i32
  }
  func.func @transform_7(%arg0: i32, %arg1: i32, %arg2: memref<2xi32, #tpu.memory_space<smem>>) -> (i32, i32, i32) {
    %c0_i32 = arith.constant 0 : i32
    %c0_i32_0 = arith.constant 0 : i32
    %c0_i32_1 = arith.constant 0 : i32
    return %arg1, %c0_i32, %c0_i32_0 : i32, i32, i32
  }
  func.func @transform_8(%arg0: i32, %arg1: i32, %arg2: memref<2xi32, #tpu.memory_space<smem>>) -> (i32, i32) {
    %c0_i32 = arith.constant 0 : i32
    %c0_i32_0 = arith.constant 0 : i32
    %c0_i32_1 = arith.constant 0 : i32
    return %c0_i32, %c0_i32_0 : i32, i32
  }
  func.func @transform_9(%arg0: i32, %arg1: i32, %arg2: memref<2xi32, #tpu.memory_space<smem>>) -> (i32, i32) {
    %c0_i32 = arith.constant 0 : i32
    %c0_i32_0 = arith.constant 0 : i32
    %c0_i32_1 = arith.constant 0 : i32
    return %c0_i32, %c0_i32_0 : i32, i32
  }
  func.func @transform_10(%arg0: i32, %arg1: i32, %arg2: memref<2xi32, #tpu.memory_space<smem>>) -> (i32, i32) {
    %c0_i32 = arith.constant 0 : i32
    %c0_i32_0 = arith.constant 0 : i32
    %c0_i32_1 = arith.constant 0 : i32
    return %c0_i32, %c0_i32_0 : i32, i32
  }
  func.func @transform_11(%arg0: i32, %arg1: i32, %arg2: memref<2xi32, #tpu.memory_space<smem>>) -> (i32, i32) {
    %c0_i32 = arith.constant 0 : i32
    %c0_i32_0 = arith.constant 0 : i32
    %c0_i32_1 = arith.constant 0 : i32
    return %c0_i32, %c0_i32_0 : i32, i32
  }
  func.func @transform_12(%arg0: i32, %arg1: i32, %arg2: memref<2xi32, #tpu.memory_space<smem>>) -> (i32, i32, i32) {
    %c0_i32 = arith.constant 0 : i32
    %c0_i32_0 = arith.constant 0 : i32
    %c0_i32_1 = arith.constant 0 : i32
    return %arg0, %c0_i32, %c0_i32_0 : i32, i32, i32
  }
  func.func @transform_13(%arg0: i32, %arg1: i32, %arg2: memref<2xi32, #tpu.memory_space<smem>>) -> (i32, i32, i32) {
    %c0_i32 = arith.constant 0 : i32
    %c0_i32_0 = arith.constant 0 : i32
    %c0_i32_1 = arith.constant 0 : i32
    return %arg0, %c0_i32, %c0_i32_0 : i32, i32, i32
  }
  func.func @transform_14(%arg0: i32, %arg1: i32, %arg2: memref<2xi32, #tpu.memory_space<smem>>) -> (i32, i32, i32) {
    %c0_i32 = arith.constant 0 : i32
    %c0_i32_0 = arith.constant 0 : i32
    %c0_i32_1 = arith.constant 0 : i32
    return %arg0, %c0_i32, %c0_i32_0 : i32, i32, i32
  }
  func.func @transform_15(%arg0: i32, %arg1: i32, %arg2: memref<2xi32, #tpu.memory_space<smem>>) -> (i32, i32, i32) {
    %c0_i32 = arith.constant 0 : i32
    %c0_i32_0 = arith.constant 0 : i32
    %c0_i32_1 = arith.constant 0 : i32
    return %arg0, %c0_i32, %c0_i32_0 : i32, i32, i32
  }
}

</mosaic_0001>

<llo_original>
// kernel: tpu_custom_call.1
$region0: #{tpu_custom_call.1}
  #allocation0 [shape = 'u32[]', space=smem, size = 0x4, offset = 0x4, fixed_abs, tag = 'smem constant byte address 0x4 - core index']
  #allocation1 [shape = 'u32[144,128]{1,0:T(1,128)}', space=vmem, size = 0x12000, scoped, tag = 'internal scratch']
  #allocation2 [shape = 'f32[32,128]{1,0:T(8,128)}', space=vmem, size = 0x4000, scoped, tag = 'scratch operand']
  #allocation3 [shape = 'f32[32,128]{1,0:T(8,128)}', space=vmem, size = 0x4000, scoped, tag = 'scratch operand']
  #allocation4 [shape = 'bf16[32,160]{1,0:T(8,128)(2,1)}', space=vmem, size = 0x4000, scoped, tag = 'scratch operand']
  #allocation5 [shape = 'bf16[160,128]{1,0:T(8,128)(2,1)}', space=vmem, size = 0xa000, scoped, tag = 'scratch operand']
  #allocation6 [shape = 's32[1]{0}', space=sflag, size = 0x4, scoped, tag = 'scoped memory for tpu_custom_call.1']
  #allocation7 [shape = 'u8[512]{0}', space=smem, size = 0x200, scoped, tag = 'prefetched SMEM operand 0']
  %s0 = inlined_call_operand.vmem [shape: s32[2], index: 0, kind: input, shape index: {}]
  %s1 = inlined_call_operand.vmem [shape: f32[2,4,128], index: 1, kind: input, shape index: {}]
  %s2 = inlined_call_operand.vmem [shape: f32[2,4,128], index: 2, kind: input, shape index: {}]
  %s3 = inlined_call_operand.vmem [shape: bf16[32,4], index: 3, kind: input, shape index: {}]
  %s4 = inlined_call_operand.vmem [shape: f32[32,1], index: 4, kind: input, shape index: {}]
  %s5 = inlined_call_operand.vmem [shape: bf16[4,64,160], index: 5, kind: input, shape index: {}]
  %s6 = inlined_call_operand.vmem [shape: f32[4,64,1], index: 6, kind: input, shape index: {}]
  %s7 = inlined_call_operand.vmem [shape: bf16[4,64,32], index: 7, kind: input, shape index: {}]
  %s8 = inlined_call_operand.vmem [shape: f32[4,64,1], index: 8, kind: input, shape index: {}]
  %s9 = inlined_call_operand.vmem [shape: bf16[4,32], index: 9, kind: input, shape index: {}]
  %s10 = inlined_call_operand.vmem [shape: f32[4,1], index: 10, kind: input, shape index: {}]
  %s11 = inlined_call_operand.vmem [shape: bf16[4,32], index: 11, kind: input, shape index: {}]
  %s12 = inlined_call_operand.vmem [shape: f32[4,1], index: 12, kind: input, shape index: {}]
  %s13 = inlined_call_operand.hbm [shape: f32[2,4,128], index: 13, kind: output, shape index: {0}]
  %s14 = inlined_call_operand.hbm [shape: f32[2,4,128], index: 14, kind: output, shape index: {1}]
  %s15 = inlined_call_operand.hbm [shape: f32[2,4,128], index: 15, kind: output, shape index: {2}]
  %s16 = inlined_call_operand.hbm [shape: f32[2,1,128], index: 16, kind: output, shape index: {3}]
  %17 = xla_tuple %s13, %s14, %s15, %s16
  %s18 = sld [smem:[#allocation0]]
  $region133: #{tpu_custom_call.1} parent=0
    _
  %s20 = ssub.s32 1, %s18
  %s21 = scalar_select 0, %s20, %s18
  %s22 = sshll.u32 %s0, 4
  %s23 = int_to_ptr.vmem [resolvable:$true] %s22
  %25 = dma.vmem_to_smem %s23, 16, [#allocation7], [#allocation6]
  %26 = dma.done [#allocation6], 16
  %27 = sfence
  $region1: #{tpu_custom_call.1} parent=0
    #allocation8 [shape = 'u8[4096]{0}', space=vmem, size = 0x1000, scoped, tag = 'output window, operand 0']
    #allocation9 [shape = 's32[2]{0}', space=sflag, size = 0x8, scoped, tag = 'scoped memory for tpu_custom_call.1']
    #allocation10 [shape = 'u8[4096]{0}', space=vmem, size = 0x1000, scoped, tag = 'output window, operand 1']
    #allocation11 [shape = 's32[2]{0}', space=sflag, size = 0x8, scoped, tag = 'scoped memory for tpu_custom_call.1']
    #allocation12 [shape = 'u8[4096]{0}', space=vmem, size = 0x1000, scoped, tag = 'output window, operand 2']
    #allocation13 [shape = 'u8[1024]{0}', space=vmem, size = 0x400, scoped, tag = 'output window, operand 3']
    #allocation14 [shape = 's32[2]{0}', space=sflag, size = 0x8, scoped, tag = 'scoped memory for tpu_custom_call.1']
    %28 = vsyncpa [#allocation9], 0
    %s29 = scalar_lea.sflag [#allocation9], 1
    %30 = vsyncpa %s29, 0
    %31 = vsyncpa [#allocation11], 0
    %s32 = scalar_lea.sflag [#allocation11], 1
    %33 = vsyncpa %s32, 0
    %34 = vsyncpa [#allocation14], 0
    %s35 = scalar_lea.sflag [#allocation14], 1
    %36 = vsyncpa %s35, 0
    loop: start=0, step=1, limit=10
    $region2: #{tpu_custom_call.1} parent=1 // loop_pre_header
      _
    $region3: #{tpu_custom_call.1} parent=1 // loop_header
      %s38 = sphi 0, %s42
      %p39 = scmp.ge.s32.totalorder %s38, 10
      %s45 = sphi 0, %s57
      %s46 = sphi 0, %s53
      %s47 = sphi 0, %s45
      %s48 = sphi 0, %s46
      %s49 = sphi 0, %s47
      %s50 = sphi 0, %s48
      %s60 = sphi 0, %s62
      %s63 = sphi 0, %s60
      %s64 = sphi 0, %s63
      %s80 = sphi 0, %s64
      %s86 = sphi 0, %s88
      %s89 = sphi 0, %s86
      %s90 = sphi 0, %s89
      %s106 = sphi 0, %s90
      %s110 = sphi 0, %s110
      %s112 = sphi 0, %s110
      %s113 = sphi 0, %s112
      %s127 = sphi 0, %s113
      %s131 = sphi 0, %s131
      %s133 = sphi 0, %s131
      %s134 = sphi 0, %s133
      %s148 = sphi 0, %s134
      %s154 = sphi 0, %s156
      %s157 = sphi 0, %s154
      %s158 = sphi 0, %s157
      %s174 = sphi 0, %s158
      %s180 = sphi 0, %s182
      %s183 = sphi 0, %s180
      %s184 = sphi 0, %s183
      %s200 = sphi 0, %s184
      %s206 = sphi 0, %s208
      %s209 = sphi 0, %s206
      %s210 = sphi 0, %s209
      %s226 = sphi 0, %s210
      %s232 = sphi 0, %s234
      %s235 = sphi 0, %s232
      %s236 = sphi 0, %s235
      %s252 = sphi 0, %s236
      %s256 = sphi 0, %s256
      %s258 = sphi 0, %s256
      %s259 = sphi 0, %s258
      %s273 = sphi 0, %s259
      %s277 = sphi 0, %s277
      %s279 = sphi 0, %s277
      %s280 = sphi 0, %s279
      %s294 = sphi 0, %s280
      %s298 = sphi 0, %s298
      %s300 = sphi 0, %s298
      %s301 = sphi 0, %s300
      %s315 = sphi 0, %s301
      %s319 = sphi 0, %s319
      %s321 = sphi 0, %s319
      %s322 = sphi 0, %s321
      %s336 = sphi 0, %s322
      %s342 = sphi 0, %s344
      %s345 = sphi 0, %s342
      %s346 = sphi 0, %s345
      %s362 = sphi 0, %s346
      %s368 = sphi 0, %s370
      %s371 = sphi 0, %s368
      %s372 = sphi 0, %s371
      %s388 = sphi 0, %s372
      %s394 = sphi 0, %s396
      %s397 = sphi 0, %s394
      %s398 = sphi 0, %s397
      %s414 = sphi 0, %s398
      %s420 = sphi 0, %s422
      %s423 = sphi 0, %s420
      %s424 = sphi 0, %s423
      %s440 = sphi 0, %s424
    $region4: #{tpu_custom_call.1} parent=1 // loop_header_branch
      %41 = sbr.rel (%p39) target = $region8
    $region5: #{tpu_custom_call.1} parent=1 // loop_body
      %s43 = ssub.s32 %s38, 1
      %s44 = ssub.s32 %s38, 2
      %s51 = sadd.s32 1, %s46
      %p52 = scmp.ge.s32.totalorder %s51, 4
      %s53 = scalar_select %p52, 0, %s51
      %s54 = sadd.s32 1, %s45
      %s55 = scalar_select %p52, %s54, %s45
      %p56 = scmp.ge.s32.totalorder %s55, 2
      %s57 = scalar_select %p56, 0, %s55
      %s58 = ssub.s32 %s45, %s57
      %p59 = scmp.eq.s32.totalorder %s58, 0
      %s61 = sadd.s32 %s60, 1
      %s62 = scalar_select %p59, %s60, %s61
      %p65 = pneg %p59
      %p66 = scmp.eq.s32.totalorder %s38, 7
      %p67 = por %p65, %p66
      %p68 = scmp.ne.s32.totalorder %s60, %s63
      %p69 = scmp.eq.s32.totalorder %s38, 0
      %p70 = por %p68, %p69
      %p71 = scmp.ne.s32.totalorder %s60, %s63
      %p72 = scmp.eq.s32.totalorder %s43, 7
      %p73 = por %p71, %p72
      %p74 = scmp.ne.s32.totalorder %s63, %s64
      %p75 = scmp.eq.s32.totalorder %s43, 0
      %p76 = por %p74, %p75
      %p77 = scmp.ne.s32.totalorder %s63, %s64
      %p78 = scmp.eq.s32.totalorder %s44, 7
      %p79 = por %p77, %p78
      %p81 = scmp.ne.s32.totalorder %s64, %s80
      %p82 = scmp.eq.s32.totalorder %s44, 0
      %p83 = por %p81, %p82
      %s84 = ssub.s32 %s45, %s57
      %p85 = scmp.eq.s32.totalorder %s84, 0
      %s87 = sadd.s32 %s86, 1
      %s88 = scalar_select %p85, %s86, %s87
      %p91 = pneg %p85
      %p92 = scmp.eq.s32.totalorder %s38, 7
      %p93 = por %p91, %p92
      %p94 = scmp.ne.s32.totalorder %s86, %s89
      %p95 = scmp.eq.s32.totalorder %s38, 0
      %p96 = por %p94, %p95
      %p97 = scmp.ne.s32.totalorder %s86, %s89
      %p98 = scmp.eq.s32.totalorder %s43, 7
      %p99 = por %p97, %p98
      %p100 = scmp.ne.s32.totalorder %s89, %s90
      %p101 = scmp.eq.s32.totalorder %s43, 0
      %p102 = por %p100, %p101
      %p103 = scmp.ne.s32.totalorder %s89, %s90
      %p104 = scmp.eq.s32.totalorder %s44, 7
      %p105 = por %p103, %p104
      %p107 = scmp.ne.s32.totalorder %s90, %s106
      %p108 = scmp.eq.s32.totalorder %s44, 0
      %p109 = por %p107, %p108
      %s111 = sadd.s32 %s110, 1
      %p114 = scmp.eq.s32.totalorder %s38, 7
      %p115 = scmp.ne.s32.totalorder %s110, %s112
      %p116 = scmp.eq.s32.totalorder %s38, 0
      %p117 = por %p115, %p116
      %p118 = scmp.ne.s32.totalorder %s110, %s112
      %p119 = scmp.eq.s32.totalorder %s43, 7
      %p120 = por %p118, %p119
      %p121 = scmp.ne.s32.totalorder %s112, %s113
      %p122 = scmp.eq.s32.totalorder %s43, 0
      %p123 = por %p121, %p122
      %p124 = scmp.ne.s32.totalorder %s112, %s113
      %p125 = scmp.eq.s32.totalorder %s44, 7
      %p126 = por %p124, %p125
      %p128 = scmp.ne.s32.totalorder %s113, %s127
      %p129 = scmp.eq.s32.totalorder %s44, 0
      %p130 = por %p128, %p129
      %s132 = sadd.s32 %s131, 1
      %p135 = scmp.eq.s32.totalorder %s38, 7
      %p136 = scmp.ne.s32.totalorder %s131, %s133
      %p137 = scmp.eq.s32.totalorder %s38, 0
      %p138 = por %p136, %p137
      %p139 = scmp.ne.s32.totalorder %s131, %s133
      %p140 = scmp.eq.s32.totalorder %s43, 7
      %p141 = por %p139, %p140
      %p142 = scmp.ne.s32.totalorder %s133, %s134
      %p143 = scmp.eq.s32.totalorder %s43, 0
      %p144 = por %p142, %p143
      %p145 = scmp.ne.s32.totalorder %s133, %s134
      %p146 = scmp.eq.s32.totalorder %s44, 7
      %p147 = por %p145, %p146
      %p149 = scmp.ne.s32.totalorder %s134, %s148
      %p150 = scmp.eq.s32.totalorder %s44, 0
      %p151 = por %p149, %p150
      %s152 = ssub.s32 %s46, %s53
      %p153 = scmp.eq.s32.totalorder %s152, 0
      %s155 = sadd.s32 %s154, 1
      %s156 = scalar_select %p153, %s154, %s155
      %p159 = pneg %p153
      %p160 = scmp.eq.s32.totalorder %s38, 7
      %p161 = por %p159, %p160
      %p162 = scmp.ne.s32.totalorder %s154, %s157
      %p163 = scmp.eq.s32.totalorder %s38, 0
      %p164 = por %p162, %p163
      %p165 = scmp.ne.s32.totalorder %s154, %s157
      %p166 = scmp.eq.s32.totalorder %s43, 7
      %p167 = por %p165, %p166
      %p168 = scmp.ne.s32.totalorder %s157, %s158
      %p169 = scmp.eq.s32.totalorder %s43, 0
      %p170 = por %p168, %p169
      %p171 = scmp.ne.s32.totalorder %s157, %s158
      %p172 = scmp.eq.s32.totalorder %s44, 7
      %p173 = por %p171, %p172
      %p175 = scmp.ne.s32.totalorder %s158, %s174
      %p176 = scmp.eq.s32.totalorder %s44, 0
      %p177 = por %p175, %p176
      %s178 = ssub.s32 %s46, %s53
      %p179 = scmp.eq.s32.totalorder %s178, 0
      %s181 = sadd.s32 %s180, 1
      %s182 = scalar_select %p179, %s180, %s181
      %p185 = pneg %p179
      %p186 = scmp.eq.s32.totalorder %s38, 7
      %p187 = por %p185, %p186
      %p188 = scmp.ne.s32.totalorder %s180, %s183
      %p189 = scmp.eq.s32.totalorder %s38, 0
      %p190 = por %p188, %p189
      %p191 = scmp.ne.s32.totalorder %s180, %s183
      %p192 = scmp.eq.s32.totalorder %s43, 7
      %p193 = por %p191, %p192
      %p194 = scmp.ne.s32.totalorder %s183, %s184
      %p195 = scmp.eq.s32.totalorder %s43, 0
      %p196 = por %p194, %p195
      %p197 = scmp.ne.s32.totalorder %s183, %s184
      %p198 = scmp.eq.s32.totalorder %s44, 7
      %p199 = por %p197, %p198
      %p201 = scmp.ne.s32.totalorder %s184, %s200
      %p202 = scmp.eq.s32.totalorder %s44, 0
      %p203 = por %p201, %p202
      %s204 = ssub.s32 %s46, %s53
      %p205 = scmp.eq.s32.totalorder %s204, 0
      %s207 = sadd.s32 %s206, 1
      %s208 = scalar_select %p205, %s206, %s207
      %p211 = pneg %p205
      %p212 = scmp.eq.s32.totalorder %s38, 7
      %p213 = por %p211, %p212
      %p214 = scmp.ne.s32.totalorder %s206, %s209
      %p215 = scmp.eq.s32.totalorder %s38, 0
      %p216 = por %p214, %p215
      %p217 = scmp.ne.s32.totalorder %s206, %s209
      %p218 = scmp.eq.s32.totalorder %s43, 7
      %p219 = por %p217, %p218
      %p220 = scmp.ne.s32.totalorder %s209, %s210
      %p221 = scmp.eq.s32.totalorder %s43, 0
      %p222 = por %p220, %p221
      %p223 = scmp.ne.s32.totalorder %s209, %s210
      %p224 = scmp.eq.s32.totalorder %s44, 7
      %p225 = por %p223, %p224
      %p227 = scmp.ne.s32.totalorder %s210, %s226
      %p228 = scmp.eq.s32.totalorder %s44, 0
      %p229 = por %p227, %p228
      %s230 = ssub.s32 %s46, %s53
      %p231 = scmp.eq.s32.totalorder %s230, 0
      %s233 = sadd.s32 %s232, 1
      %s234 = scalar_select %p231, %s232, %s233
      %p237 = pneg %p231
      %p238 = scmp.eq.s32.totalorder %s38, 7
      %p239 = por %p237, %p238
      %p240 = scmp.ne.s32.totalorder %s232, %s235
      %p241 = scmp.eq.s32.totalorder %s38, 0
      %p242 = por %p240, %p241
      %p243 = scmp.ne.s32.totalorder %s232, %s235
      %p244 = scmp.eq.s32.totalorder %s43, 7
      %p245 = por %p243, %p244
      %p246 = scmp.ne.s32.totalorder %s235, %s236
      %p247 = scmp.eq.s32.totalorder %s43, 0
      %p248 = por %p246, %p247
      %p249 = scmp.ne.s32.totalorder %s235, %s236
      %p250 = scmp.eq.s32.totalorder %s44, 7
      %p251 = por %p249, %p250
      %p253 = scmp.ne.s32.totalorder %s236, %s252
      %p254 = scmp.eq.s32.totalorder %s44, 0
      %p255 = por %p253, %p254
      %s257 = sadd.s32 %s256, 1
      %p260 = scmp.eq.s32.totalorder %s38, 7
      %p261 = scmp.ne.s32.totalorder %s256, %s258
      %p262 = scmp.eq.s32.totalorder %s38, 0
      %p263 = por %p261, %p262
      %p264 = scmp.ne.s32.totalorder %s256, %s258
      %p265 = scmp.eq.s32.totalorder %s43, 7
      %p266 = por %p264, %p265
      %p267 = scmp.ne.s32.totalorder %s258, %s259
      %p268 = scmp.eq.s32.totalorder %s43, 0
      %p269 = por %p267, %p268
      %p270 = scmp.ne.s32.totalorder %s258, %s259
      %p271 = scmp.eq.s32.totalorder %s44, 7
      %p272 = por %p270, %p271
      %p274 = scmp.ne.s32.totalorder %s259, %s273
      %p275 = scmp.eq.s32.totalorder %s44, 0
      %p276 = por %p274, %p275
      %s278 = sadd.s32 %s277, 1
      %p281 = scmp.eq.s32.totalorder %s38, 7
      %p282 = scmp.ne.s32.totalorder %s277, %s279
      %p283 = scmp.eq.s32.totalorder %s38, 0
      %p284 = por %p282, %p283
      %p285 = scmp.ne.s32.totalorder %s277, %s279
      %p286 = scmp.eq.s32.totalorder %s43, 7
      %p287 = por %p285, %p286
      %p288 = scmp.ne.s32.totalorder %s279, %s280
      %p289 = scmp.eq.s32.totalorder %s43, 0
      %p290 = por %p288, %p289
      %p291 = scmp.ne.s32.totalorder %s279, %s280
      %p292 = scmp.eq.s32.totalorder %s44, 7
      %p293 = por %p291, %p292
      %p295 = scmp.ne.s32.totalorder %s280, %s294
      %p296 = scmp.eq.s32.totalorder %s44, 0
      %p297 = por %p295, %p296
      %s299 = sadd.s32 %s298, 1
      %p302 = scmp.eq.s32.totalorder %s38, 7
      %p303 = scmp.ne.s32.totalorder %s298, %s300
      %p304 = scmp.eq.s32.totalorder %s38, 0
      %p305 = por %p303, %p304
      %p306 = scmp.ne.s32.totalorder %s298, %s300
      %p307 = scmp.eq.s32.totalorder %s43, 7
      %p308 = por %p306, %p307
      %p309 = scmp.ne.s32.totalorder %s300, %s301
      %p310 = scmp.eq.s32.totalorder %s43, 0
      %p311 = por %p309, %p310
      %p312 = scmp.ne.s32.totalorder %s300, %s301
      %p313 = scmp.eq.s32.totalorder %s44, 7
      %p314 = por %p312, %p313
      %p316 = scmp.ne.s32.totalorder %s301, %s315
      %p317 = scmp.eq.s32.totalorder %s44, 0
      %p318 = por %p316, %p317
      %s320 = sadd.s32 %s319, 1
      %p323 = scmp.eq.s32.totalorder %s38, 7
      %p324 = scmp.ne.s32.totalorder %s319, %s321
      %p325 = scmp.eq.s32.totalorder %s38, 0
      %p326 = por %p324, %p325
      %p327 = scmp.ne.s32.totalorder %s319, %s321
      %p328 = scmp.eq.s32.totalorder %s43, 7
      %p329 = por %p327, %p328
      %p330 = scmp.ne.s32.totalorder %s321, %s322
      %p331 = scmp.eq.s32.totalorder %s43, 0
      %p332 = por %p330, %p331
      %p333 = scmp.ne.s32.totalorder %s321, %s322
      %p334 = scmp.eq.s32.totalorder %s44, 7
      %p335 = por %p333, %p334
      %p337 = scmp.ne.s32.totalorder %s322, %s336
      %p338 = scmp.eq.s32.totalorder %s44, 0
      %p339 = por %p337, %p338
      %s340 = ssub.s32 %s45, %s57
      %p341 = scmp.eq.s32.totalorder %s340, 0
      %s343 = sadd.s32 %s342, 1
      %s344 = scalar_select %p341, %s342, %s343
      %p347 = pneg %p341
      %p348 = scmp.eq.s32.totalorder %s38, 7
      %p349 = por %p347, %p348
      %p350 = scmp.ne.s32.totalorder %s342, %s345
      %p351 = scmp.eq.s32.totalorder %s38, 0
      %p352 = por %p350, %p351
      %p353 = scmp.ne.s32.totalorder %s342, %s345
      %p354 = scmp.eq.s32.totalorder %s43, 7
      %p355 = por %p353, %p354
      %p356 = scmp.ne.s32.totalorder %s345, %s346
      %p357 = scmp.eq.s32.totalorder %s43, 0
      %p358 = por %p356, %p357
      %p359 = scmp.ne.s32.totalorder %s345, %s346
      %p360 = scmp.eq.s32.totalorder %s44, 7
      %p361 = por %p359, %p360
      %p363 = scmp.ne.s32.totalorder %s346, %s362
      %p364 = scmp.eq.s32.totalorder %s44, 0
      %p365 = por %p363, %p364
      %s366 = ssub.s32 %s45, %s57
      %p367 = scmp.eq.s32.totalorder %s366, 0
      %s369 = sadd.s32 %s368, 1
      %s370 = scalar_select %p367, %s368, %s369
      %p373 = pneg %p367
      %p374 = scmp.eq.s32.totalorder %s38, 7
      %p375 = por %p373, %p374
      %p376 = scmp.ne.s32.totalorder %s368, %s371
      %p377 = scmp.eq.s32.totalorder %s38, 0
      %p378 = por %p376, %p377
      %p379 = scmp.ne.s32.totalorder %s368, %s371
      %p380 = scmp.eq.s32.totalorder %s43, 7
      %p381 = por %p379, %p380
      %p382 = scmp.ne.s32.totalorder %s371, %s372
      %p383 = scmp.eq.s32.totalorder %s43, 0
      %p384 = por %p382, %p383
      %p385 = scmp.ne.s32.totalorder %s371, %s372
      %p386 = scmp.eq.s32.totalorder %s44, 7
      %p387 = por %p385, %p386
      %p389 = scmp.ne.s32.totalorder %s372, %s388
      %p390 = scmp.eq.s32.totalorder %s44, 0
      %p391 = por %p389, %p390
      %s392 = ssub.s32 %s45, %s57
      %p393 = scmp.eq.s32.totalorder %s392, 0
      %s395 = sadd.s32 %s394, 1
      %s396 = scalar_select %p393, %s394, %s395
      %p399 = pneg %p393
      %p400 = scmp.eq.s32.totalorder %s38, 7
      %p401 = por %p399, %p400
      %p402 = scmp.ne.s32.totalorder %s394, %s397
      %p403 = scmp.eq.s32.totalorder %s38, 0
      %p404 = por %p402, %p403
      %p405 = scmp.ne.s32.totalorder %s394, %s397
      %p406 = scmp.eq.s32.totalorder %s43, 7
      %p407 = por %p405, %p406
      %p408 = scmp.ne.s32.totalorder %s397, %s398
      %p409 = scmp.eq.s32.totalorder %s43, 0
      %p410 = por %p408, %p409
      %p411 = scmp.ne.s32.totalorder %s397, %s398
      %p412 = scmp.eq.s32.totalorder %s44, 7
      %p413 = por %p411, %p412
      %p415 = scmp.ne.s32.totalorder %s398, %s414
      %p416 = scmp.eq.s32.totalorder %s44, 0
      %p417 = por %p415, %p416
      %s418 = ssub.s32 %s45, %s57
      %p419 = scmp.eq.s32.totalorder %s418, 0
      %s421 = sadd.s32 %s420, 1
      %s422 = scalar_select %p419, %s420, %s421
      %p425 = pneg %p419
      %p426 = scmp.eq.s32.totalorder %s38, 7
      %p427 = por %p425, %p426
      %p428 = scmp.ne.s32.totalorder %s420, %s423
      %p429 = scmp.eq.s32.totalorder %s38, 0
      %p430 = por %p428, %p429
      %p431 = scmp.ne.s32.totalorder %s420, %s423
      %p432 = scmp.eq.s32.totalorder %s43, 7
      %p433 = por %p431, %p432
      %p434 = scmp.ne.s32.totalorder %s423, %s424
      %p435 = scmp.eq.s32.totalorder %s43, 0
      %p436 = por %p434, %p435
      %p437 = scmp.ne.s32.totalorder %s423, %s424
      %p438 = scmp.eq.s32.totalorder %s44, 7
      %p439 = por %p437, %p438
      %p441 = scmp.ne.s32.totalorder %s424, %s440
      %p442 = scmp.eq.s32.totalorder %s44, 0
      %p443 = por %p441, %p442
      %p444 = scmp.le.s32.totalorder 1, %s38
      %p445 = scmp.lt.s32.totalorder %s38, 9
      %p446 = pnand %p444, %p445
      %p447 = pneg %p446
      // Predicated region
      $region9: #{tpu_custom_call.1} parent=5 // pred_check
        _
      $region10: #{tpu_custom_call.1} parent=5 // pred_check_branch
        %449 = sbr.rel (%p446) target = $region12
      $region11: #{tpu_custom_call.1} parent=5 // pred_region
        %s450 = ssub.s32 %s38, 1
        // Predicated region
        $region13: #{tpu_custom_call.1} parent=11 // pred_check
          %p451 = pneg %p123
        $region14: #{tpu_custom_call.1} parent=11 // pred_check_branch
          %453 = sbr.rel (%p451) target = $region16
        $region15: #{tpu_custom_call.1} parent=11 // pred_region
          _
        $region16: #{tpu_custom_call.1} parent=11 // pred_fallthru
          _
        // Predicated region
        $region17: #{tpu_custom_call.1} parent=11 // pred_check
          %p454 = pneg %p144
        $region18: #{tpu_custom_call.1} parent=11 // pred_check_branch
          %456 = sbr.rel (%p454) target = $region20
        $region19: #{tpu_custom_call.1} parent=11 // pred_region
          _
        $region20: #{tpu_custom_call.1} parent=11 // pred_fallthru
          _
        // Predicated region
        $region21: #{tpu_custom_call.1} parent=11 // pred_check
          %p457 = pneg %p269
        $region22: #{tpu_custom_call.1} parent=11 // pred_check_branch
          %459 = sbr.rel (%p457) target = $region24
        $region23: #{tpu_custom_call.1} parent=11 // pred_region
          _
        $region24: #{tpu_custom_call.1} parent=11 // pred_fallthru
          _
        // Predicated region
        $region25: #{tpu_custom_call.1} parent=11 // pred_check
          %p460 = pneg %p290
        $region26: #{tpu_custom_call.1} parent=11 // pred_check_branch
          %462 = sbr.rel (%p460) target = $region28
        $region27: #{tpu_custom_call.1} parent=11 // pred_region
          _
        $region28: #{tpu_custom_call.1} parent=11 // pred_fallthru
          _
        // Predicated region
        $region29: #{tpu_custom_call.1} parent=11 // pred_check
          %p463 = pneg %p311
        $region30: #{tpu_custom_call.1} parent=11 // pred_check_branch
          %465 = sbr.rel (%p463) target = $region32
        $region31: #{tpu_custom_call.1} parent=11 // pred_region
          _
        $region32: #{tpu_custom_call.1} parent=11 // pred_fallthru
          _
        // Predicated region
        $region33: #{tpu_custom_call.1} parent=11 // pred_check
          %p466 = pneg %p332
        $region34: #{tpu_custom_call.1} parent=11 // pred_check_branch
          %468 = sbr.rel (%p466) target = $region36
        $region35: #{tpu_custom_call.1} parent=11 // pred_region
          _
        $region36: #{tpu_custom_call.1} parent=11 // pred_fallthru
          _
      $region12: #{tpu_custom_call.1} parent=5 // pred_fallthru
        _
      %p469 = scmp.lt.s32.totalorder %s38, 8
      // Predicated region
      $region37: #{tpu_custom_call.1} parent=5 // pred_check
        %p470 = pneg %p469
      $region38: #{tpu_custom_call.1} parent=5 // pred_check_branch
        %472 = sbr.rel (%p470) target = $region40
      $region39: #{tpu_custom_call.1} parent=5 // pred_region
        // Predicated region
        $region41: #{tpu_custom_call.1} parent=39 // pred_check
          %p473 = pneg %p70
        $region42: #{tpu_custom_call.1} parent=39 // pred_check_branch
          %475 = sbr.rel (%p473) target = $region44
        $region43: #{tpu_custom_call.1} parent=39 // pred_region
          %p476 = scmp.lt.s32.totalorder %s45, 1
          %s477 = scalar_select %p476, %s45, 1
          %s478 = smul.addr %s477, 4
          %s479 = scalar_lea.vmem %s1, %s478
        $region44: #{tpu_custom_call.1} parent=39 // pred_fallthru
          _
        // Predicated region
        $region45: #{tpu_custom_call.1} parent=39 // pred_check
          %p480 = pneg %p96
        $region46: #{tpu_custom_call.1} parent=39 // pred_check_branch
          %482 = sbr.rel (%p480) target = $region48
        $region47: #{tpu_custom_call.1} parent=39 // pred_region
          %p483 = scmp.lt.s32.totalorder %s45, 1
          %s484 = scalar_select %p483, %s45, 1
          %s485 = smul.addr %s484, 4
          %s486 = scalar_lea.vmem %s2, %s485
        $region48: #{tpu_custom_call.1} parent=39 // pred_fallthru
          _
        // Predicated region
        $region49: #{tpu_custom_call.1} parent=39 // pred_check
          %p487 = pneg %p164
        $region50: #{tpu_custom_call.1} parent=39 // pred_check_branch
          %489 = sbr.rel (%p487) target = $region52
        $region51: #{tpu_custom_call.1} parent=39 // pred_region
          %p490 = scmp.lt.s32.totalorder %s46, 3
          %s491 = scalar_select %p490, %s46, 3
          %s492 = smul.addr %s491, 16
          %s493 = smul.addr %s492, 4
          %s494 = scalar_lea.vmem %s5, %s493
        $region52: #{tpu_custom_call.1} parent=39 // pred_fallthru
          _
        // Predicated region
        $region53: #{tpu_custom_call.1} parent=39 // pred_check
          %p495 = pneg %p190
        $region54: #{tpu_custom_call.1} parent=39 // pred_check_branch
          %497 = sbr.rel (%p495) target = $region56
        $region55: #{tpu_custom_call.1} parent=39 // pred_region
          %p498 = scmp.lt.s32.totalorder %s46, 3
          %s499 = scalar_select %p498, %s46, 3
          %s500 = smul.addr %s499, 8
          %s501 = smul.addr %s500, 8
          %s502 = scalar_lea.vmem %s6, %s501
        $region56: #{tpu_custom_call.1} parent=39 // pred_fallthru
          _
        // Predicated region
        $region57: #{tpu_custom_call.1} parent=39 // pred_check
          %p503 = pneg %p216
        $region58: #{tpu_custom_call.1} parent=39 // pred_check_branch
          %505 = sbr.rel (%p503) target = $region60
        $region59: #{tpu_custom_call.1} parent=39 // pred_region
          %p506 = scmp.lt.s32.totalorder %s46, 3
          %s507 = scalar_select %p506, %s46, 3
          %s508 = smul.addr %s507, 8
          %s509 = smul.addr %s508, 4
          %s510 = scalar_lea.vmem %s7, %s509
        $region60: #{tpu_custom_call.1} parent=39 // pred_fallthru
          _
        // Predicated region
        $region61: #{tpu_custom_call.1} parent=39 // pred_check
          %p511 = pneg %p242
        $region62: #{tpu_custom_call.1} parent=39 // pred_check_branch
          %513 = sbr.rel (%p511) target = $region64
        $region63: #{tpu_custom_call.1} parent=39 // pred_region
          %p514 = scmp.lt.s32.totalorder %s46, 3
          %s515 = scalar_select %p514, %s46, 3
          %s516 = smul.addr %s515, 8
          %s517 = smul.addr %s516, 8
          %s518 = scalar_lea.vmem %s8, %s517
        $region64: #{tpu_custom_call.1} parent=39 // pred_fallthru
          _
      $region40: #{tpu_custom_call.1} parent=5 // pred_fallthru
        _
      %p519 = scmp.le.s32.totalorder 1, %s38
      %p520 = scmp.lt.s32.totalorder %s38, 9
      %p521 = pnand %p519, %p520
      %p522 = pneg %p521
      // Predicated region
      $region65: #{tpu_custom_call.1} parent=5 // pred_check
        _
      $region66: #{tpu_custom_call.1} parent=5 // pred_check_branch
        %524 = sbr.rel (%p521) target = $region68
      $region67: #{tpu_custom_call.1} parent=5 // pred_region
        %s525 = ssub.s32 %s38, 1
        %p526 = scmp.lt.s32.totalorder %s47, 1
        %s527 = scalar_select %p526, %s47, 1
        %s528 = smul.addr %s527, 4
        %s529 = scalar_lea.vmem %s1, %s528
        %p530 = pneg %p76
        %p531 = pneg %p73
        %p532 = scmp.lt.s32.totalorder %s47, 1
        %s533 = scalar_select %p532, %s47, 1
        %s534 = smul.addr %s533, 4
        %s535 = scalar_lea.vmem %s2, %s534
        %p536 = pneg %p102
        %p537 = pneg %p99
        %p538 = pneg %p123
        %p539 = pneg %p120
        %p540 = pneg %p144
        %p541 = pneg %p141
        %p542 = scmp.lt.s32.totalorder %s48, 3
        %s543 = scalar_select %p542, %s48, 3
        %s544 = smul.addr %s543, 16
        %s545 = smul.addr %s544, 4
        %s546 = scalar_lea.vmem %s5, %s545
        %p547 = pneg %p170
        %p548 = pneg %p167
        %p549 = scmp.lt.s32.totalorder %s48, 3
        %s550 = scalar_select %p549, %s48, 3
        %s551 = smul.addr %s550, 8
        %s552 = smul.addr %s551, 8
        %s553 = scalar_lea.vmem %s6, %s552
        %p554 = pneg %p196
        %p555 = pneg %p193
        %p556 = scmp.lt.s32.totalorder %s48, 3
        %s557 = scalar_select %p556, %s48, 3
        %s558 = smul.addr %s557, 8
        %s559 = smul.addr %s558, 4
        %s560 = scalar_lea.vmem %s7, %s559
        %p561 = pneg %p222
        %p562 = pneg %p219
        %p563 = scmp.lt.s32.totalorder %s48, 3
        %s564 = scalar_select %p563, %s48, 3
        %s565 = smul.addr %s564, 8
        %s566 = smul.addr %s565, 8
        %s567 = scalar_lea.vmem %s8, %s566
        %p568 = pneg %p248
        %p569 = pneg %p245
        %p570 = pneg %p269
        %p571 = pneg %p266
        %p572 = pneg %p290
        %p573 = pneg %p287
        %p574 = pneg %p311
        %p575 = pneg %p308
        %p576 = pneg %p332
        %p577 = pneg %p329
        %p578 = pneg %p358
        %p579 = pneg %p355
        %s580 = sand.u32 %s345, 1
        %s581 = scalar_lea.sflag [#allocation9], %s580
        %s582 = sand.u32 %s345, 1
        %s583 = smul.addr %s582, 4
        %s584 = scalar_lea.vmem [#allocation8], %s583
        %p585 = pneg %p384
        %p586 = pneg %p381
        %s587 = sand.u32 %s43, 1
        %s588 = scalar_lea.sflag [#allocation11], %s587
        %s589 = sand.u32 %s371, 1
        %s590 = smul.addr %s589, 4
        %s591 = scalar_lea.vmem [#allocation10], %s590
        %p592 = pneg %p410
        %p593 = pneg %p407
        %s594 = sand.u32 %s43, 1
        %s595 = scalar_lea.sflag [#allocation11], %s594
        %s596 = sand.u32 %s397, 1
        %s597 = smul.addr %s596, 4
        %s598 = scalar_lea.vmem [#allocation12], %s597
        %p599 = pneg %p436
        %p600 = pneg %p433
        %s601 = sand.u32 %s423, 1
        %s602 = scalar_lea.sflag [#allocation14], %s601
        %s603 = sand.u32 %s423, 1
        %s604 = scalar_lea.vmem [#allocation13], %s603
        %p605 = scmp.lt.s32.totalorder %s47, 1
        %s606 = scalar_select %p605, %s47, 1
        %s607 = smul.addr %s606, 4
        %s608 = scalar_lea.vmem %s1, %s607
        %p609 = scmp.lt.s32.totalorder %s47, 1
        %s610 = scalar_select %p609, %s47, 1
        %s611 = smul.addr %s610, 4
        %s612 = scalar_lea.vmem %s2, %s611
        %p613 = scmp.lt.s32.totalorder %s48, 3
        %s614 = scalar_select %p613, %s48, 3
        %s615 = smul.addr %s614, 16
        %s616 = smul.addr %s615, 4
        %s617 = scalar_lea.vmem %s5, %s616
        %p618 = scmp.lt.s32.totalorder %s48, 3
        %s619 = scalar_select %p618, %s48, 3
        %s620 = smul.addr %s619, 8
        %s621 = smul.addr %s620, 8
        %s622 = scalar_lea.vmem %s6, %s621
        %p623 = scmp.lt.s32.totalorder %s48, 3
        %s624 = scalar_select %p623, %s48, 3
        %s625 = smul.addr %s624, 8
        %s626 = smul.addr %s625, 4
        %s627 = scalar_lea.vmem %s7, %s626
        %p628 = scmp.lt.s32.totalorder %s48, 3
        %s629 = scalar_select %p628, %s48, 3
        %s630 = smul.addr %s629, 8
        %s631 = smul.addr %s630, 8
        %s632 = scalar_lea.vmem %s8, %s631
        %v634 = vlaneseq
        %v635 = vand.u32 %v634, 127
        %s636 = sld [smem:[#allocation7 + %s47]]
        %v637 = vstv %s636
        %vm638 = vcmp.lt.s32.totalorder %v635, %v637
        %v639 = vsel %vm638, 1, 0
        %v640 = vcvt.s32.f32 %v639
        %p641 = scmp.eq.s32.totalorder %s48, 0
        // Predicated region
        $region69: #{tpu_custom_call.1} parent=67 // pred_check
          %p642 = pneg %p641
        $region70: #{tpu_custom_call.1} parent=67 // pred_check_branch
          %644 = sbr.rel (%p642) target = $region72
        $region71: #{tpu_custom_call.1} parent=67 // pred_region
          %v645 = vld [vmem:[%s608] sm:$0xf]
          %v646 = vpack.c.bf16 %v645, %v645
          %v647 = vld [vmem:[%s3] sm:$0xf]
          %v648 = vld [vmem:[%s3 + $0x4] sm:$0xf]
          %v649 = vld [vmem:[%s3 + $0x8] sm:$0xf]
          %v650 = vld [vmem:[%s3 + $0xc] sm:$0xf]
          %v651 = vld [vmem:[%s4] sm:$0xff]
          %v652 = vld [vmem:[%s4 + $0x8] sm:$0xff]
          %v653 = vld [vmem:[%s4 + $0x10] sm:$0xff]
          %v654 = vld [vmem:[%s4 + $0x18] sm:$0xff]
          %656 = vset.pattern.permute.xlu0 0
          %657 = vperm.xlu0 %656, %v651
          %v658 = vpop.permute.xlu0 %657
          %661 = vset.pattern.permute.xlu0 0
          %662 = vperm.xlu0 %661, %v652
          %v663 = vpop.permute.xlu0 %662
          %666 = vset.pattern.permute.xlu0 0
          %667 = vperm.xlu0 %666, %v653
          %v668 = vpop.permute.xlu0 %667
          %671 = vset.pattern.permute.xlu0 0
          %672 = vperm.xlu0 %671, %v654
          %v673 = vpop.permute.xlu0 %672
          %v679 = vunpack.c.l.b16 %v647
          %v680 = vunpack.c.l.b16 %v648
          %v681 = vunpack.c.l.b16 %v649
          %v682 = vunpack.c.l.b16 %v650
          %v683 = vpack.c.b16 %v680, %v679
          %v684 = vpack.c.b16 %v682, %v681
          %vm685 = vcmask 31744
          %v687 = vsel %vm685, %v683, 0
          %v690 = vsel %vm685, %v684, 0
          %vm692 = vcmask 1041408
          %v694 = vsel %vm692, %v646, 0
          %696 = vmatprep.subr.bf16.mxu0 0
          %697 = vmatpush1.bf16.msra.mxu0 0
          %698 = vmatprep.subr.bf16.mxu0 0
          %699 = vmatpush1.bf16.msra.mxu0 0
          %700 = vmatprep.subr.bf16.mxu0 0
          %701 = vmatpush1.bf16.msra.mxu0 0
          %702 = vmatprep.subr.bf16.mxu0 0
          %703 = vmatpush1.bf16.msra.mxu0 0
          %704 = vmatprep.subr.bf16.mxu0 0
          %705 = vmatpush1.bf16.msra.mxu0 0
          %706 = vmatprep.subr.bf16.mxu0 0
          %707 = vmatpush1.bf16.msra.mxu0 0
          %708 = vmatprep.subr.bf16.mxu0 0
          %709 = vmatpush1.bf16.msra.mxu0 0
          %710 = vmatprep.subr.bf16.mxu0 0
          %711 = vmatpush1.bf16.msra.mxu0 %v694
          %712 = vmatprep.subr.bf16.mxu0 0
          %713 = vmatpush2.bf16.msra.mxu0 0
          %714 = vmatprep.subr.bf16.mxu0 0
          %715 = vmatpush2.bf16.msra.mxu0 0
          %716 = vmatprep.subr.bf16.mxu0 0
          %717 = vmatpush2.bf16.msra.mxu0 0
          %718 = vmatprep.subr.bf16.mxu0 0
          %719 = vmatpush2.bf16.msra.mxu0 0
          %720 = vmatprep.subr.bf16.mxu0 0
          %721 = vmatpush2.bf16.msra.mxu0 0
          %722 = vmatprep.subr.bf16.mxu0 0
          %723 = vmatpush2.bf16.msra.mxu0 0
          %724 = vmatprep.subr.bf16.mxu0 0
          %725 = vmatpush2.bf16.msra.mxu0 0
          %726 = vmatprep.subr.bf16.mxu0 0
          %727 = vmatpush2.bf16.msra.mxu0 0
          %728 = vmatprep.mubr.bf16.mxu0 0
          %729 = vmatmul.mubr.bf16.gmra.mxu0 %v687
          %v730 = vpop.f32.mrf.mxu0
          %v731 = vadd.f32 %v658, %v730
          %v732 = vpop.f32.mrf.mxu0
          %v733 = vpop.f32.mrf.mxu0
          %v734 = vadd.f32 %v663, %v733
          %v735 = vpop.f32.mrf.mxu0
          %736 = vmatprep.mubr.bf16.mxu0 0
          %737 = vmatmul.mubr.bf16.gmra.mxu0 %v690
          %v738 = vpop.f32.mrf.mxu0
          %v739 = vadd.f32 %v668, %v738
          %v740 = vpop.f32.mrf.mxu0
          %v741 = vpop.f32.mrf.mxu0
          %v742 = vadd.f32 %v673, %v741
          %v743 = vpop.f32.mrf.mxu0
          %744 = vdwg.mxu0
          %v745 = vmul.f32 %v731, %v640
          %v746 = vmul.f32 %v734, %v640
          %v747 = vmul.f32 %v739, %v640
          %v748 = vmul.f32 %v742, %v640
          %749 = vst [vmem:[#allocation2] sm:$0xff] %v745
          %750 = vst [vmem:[#allocation2 + $0x8] sm:$0xff] %v746
          %751 = vst [vmem:[#allocation2 + $0x10] sm:$0xff] %v747
          %752 = vst [vmem:[#allocation2 + $0x18] sm:$0xff] %v748
          %753 = vst [vmem:[#allocation3] sm:$0xff] 0.0
          %754 = vst [vmem:[#allocation3 + $0x8] sm:$0xff] 0.0
          %755 = vst [vmem:[#allocation3 + $0x10] sm:$0xff] 0.0
          %756 = vst [vmem:[#allocation3 + $0x18] sm:$0xff] 0.0
          %vm757 = vcmask 125952
          %758 = vst.msk [vmem:[#allocation4] sm:$0xf] %vm757, 0
          %759 = vst.msk [vmem:[#allocation4 + $0x8] sm:$0xf] %vm757, 0
          %760 = vst.msk [vmem:[#allocation4 + $0x10] sm:$0xf] %vm757, 0
          %761 = vst.msk [vmem:[#allocation4 + $0x18] sm:$0xf] %vm757, 0
          %vm762 = vcmask 257152
          %763 = vst.msk [vmem:[#allocation4 + $0x4] sm:$0xf] %vm762, 0
          %764 = vst.msk [vmem:[#allocation4 + $0xc] sm:$0xf] %vm762, 0
          %765 = vst.msk [vmem:[#allocation4 + $0x14] sm:$0xf] %vm762, 0
          %766 = vst.msk [vmem:[#allocation4 + $0x1c] sm:$0xf] %vm762, 0
        $region72: #{tpu_custom_call.1} parent=67 // pred_fallthru
          _
        %v767 = vld [vmem:[#allocation2] sm:$0xff]
        %v768 = vld [vmem:[#allocation2 + $0x8] sm:$0xff]
        %v769 = vld [vmem:[#allocation2 + $0x10] sm:$0xff]
        %v770 = vld [vmem:[#allocation2 + $0x18] sm:$0xff]
        %v771 = vpack.c.bf16 %v768, %v767
        %v772 = vpack.c.bf16 %v770, %v769
        %v775 = vunpack.c.l.b16 %v771
        %v776 = vunpack.c.h.b16 %v771
        %v777 = vunpack.c.l.b16 %v772
        %v778 = vunpack.c.h.b16 %v772
        %v779 = vpack.c.b16 %v775, %v775
        %v780 = vpack.c.b16 %v776, %v776
        %v781 = vpack.c.b16 %v777, %v777
        %v782 = vpack.c.b16 %v778, %v778
        %783 = vrot.lane.b32.xlu0 %v779, 16
        %v784 = vpop.permute.xlu0 %783
        %785 = vrot.lane.b32.xlu0 %v780, 16
        %v786 = vpop.permute.xlu0 %785
        %787 = vrot.lane.b32.xlu0 %v781, 16
        %v788 = vpop.permute.xlu0 %787
        %789 = vrot.lane.b32.xlu0 %v782, 16
        %v790 = vpop.permute.xlu0 %789
        %v791 = vrot.slane %v784, 4
        %v792 = vrot.slane %v786, 4
        %v793 = vrot.slane %v788, 4
        %v794 = vrot.slane %v790, 4
        %vm795 = vcmask 130048
        %v796 = vsel %vm795, %v791, %v784
        %v797 = vsel %vm795, %v792, %v786
        %v798 = vsel %vm795, %v793, %v788
        %v799 = vsel %vm795, %v794, %v790
        %vm804 = vcmask 1043584
        %vm805 = vcmask 130052
        %vm806 = vmor %vm805, %vm804
        %807 = vst.msk [vmem:[#allocation4] sm:$0xff] %vm806, %v796
        %808 = vst.msk [vmem:[#allocation4 + $0x8] sm:$0xff] %vm806, %v797
        %809 = vst.msk [vmem:[#allocation4 + $0x10] sm:$0xff] %vm806, %v798
        %810 = vst.msk [vmem:[#allocation4 + $0x18] sm:$0xff] %vm806, %v799
        // Predicated region
        $region73: #{tpu_custom_call.1} parent=67 // pred_check
          %p811 = pneg %p641
        $region74: #{tpu_custom_call.1} parent=67 // pred_check_branch
          %813 = sbr.rel (%p811) target = $region76
        $region75: #{tpu_custom_call.1} parent=67 // pred_region
          %v814 = vld [vmem:[#allocation4] sm:$0xff]
          %v815 = vld [vmem:[#allocation4 + $0x8] sm:$0xff]
          %v816 = vld [vmem:[#allocation4 + $0x10] sm:$0xff]
          %v817 = vld [vmem:[#allocation4 + $0x18] sm:$0xff]
          %822 = vrot.lane.b32.xlu0 %v814, 114
          %v823 = vpop.permute.xlu0 %822
          %824 = vrot.lane.b32.xlu0 %v815, 114
          %v825 = vpop.permute.xlu0 %824
          %826 = vrot.lane.b32.xlu0 %v816, 114
          %v827 = vpop.permute.xlu0 %826
          %828 = vrot.lane.b32.xlu0 %v817, 114
          %v829 = vpop.permute.xlu0 %828
          %v830 = vrot.slane %v823, 4
          %v831 = vrot.slane %v825, 4
          %v832 = vrot.slane %v827, 4
          %v833 = vrot.slane %v829, 4
          %vm834 = vcmask 932864
          %v835 = vsel %vm834, %v823, %v830
          %v836 = vsel %vm834, %v825, %v831
          %v837 = vsel %vm834, %v827, %v832
          %v838 = vsel %vm834, %v829, %v833
          %843 = vst [vmem:[#allocation5] sm:$0xf] %v835
          %844 = vst [vmem:[#allocation5 + $0x4] sm:$0xf] %v836
          %845 = vst [vmem:[#allocation5 + $0x8] sm:$0xf] %v837
          %846 = vst [vmem:[#allocation5 + $0xc] sm:$0xf] %v838
          %v847 = vld [vmem:[#allocation4] sm:$0xff]
          %v848 = vld [vmem:[#allocation4 + $0x8] sm:$0xff]
          %v849 = vld [vmem:[#allocation4 + $0x10] sm:$0xff]
          %v850 = vld [vmem:[#allocation4 + $0x18] sm:$0xff]
          %855 = vrot.lane.b32.xlu0 %v847, 113
          %v856 = vpop.permute.xlu0 %855
          %857 = vrot.lane.b32.xlu0 %v848, 113
          %v858 = vpop.permute.xlu0 %857
          %859 = vrot.lane.b32.xlu0 %v849, 113
          %v860 = vpop.permute.xlu0 %859
          %861 = vrot.lane.b32.xlu0 %v850, 113
          %v862 = vpop.permute.xlu0 %861
          %v863 = vrot.slane %v856, 4
          %v864 = vrot.slane %v858, 4
          %v865 = vrot.slane %v860, 4
          %v866 = vrot.slane %v862, 4
          %vm867 = vcmask 924672
          %v868 = vsel %vm867, %v856, %v863
          %v869 = vsel %vm867, %v858, %v864
          %v870 = vsel %vm867, %v860, %v865
          %v871 = vsel %vm867, %v862, %v866
          %876 = vst [vmem:[#allocation5 + $0x10] sm:$0xf] %v868
          %877 = vst [vmem:[#allocation5 + $0x14] sm:$0xf] %v869
          %878 = vst [vmem:[#allocation5 + $0x18] sm:$0xf] %v870
          %879 = vst [vmem:[#allocation5 + $0x1c] sm:$0xf] %v871
          %v880 = vld [vmem:[#allocation4] sm:$0xff]
          %v881 = vld [vmem:[#allocation4 + $0x8] sm:$0xff]
          %v882 = vld [vmem:[#allocation4 + $0x10] sm:$0xff]
          %v883 = vld [vmem:[#allocation4 + $0x18] sm:$0xff]
          %888 = vrot.lane.b32.xlu0 %v880, 112
          %v889 = vpop.permute.xlu0 %888
          %890 = vrot.lane.b32.xlu0 %v881, 112
          %v891 = vpop.permute.xlu0 %890
          %892 = vrot.lane.b32.xlu0 %v882, 112
          %v893 = vpop.permute.xlu0 %892
          %894 = vrot.lane.b32.xlu0 %v883, 112
          %v895 = vpop.permute.xlu0 %894
          %v896 = vrot.slane %v889, 4
          %v897 = vrot.slane %v891, 4
          %v898 = vrot.slane %v893, 4
          %v899 = vrot.slane %v895, 4
          %vm900 = vcmask 916480
          %v901 = vsel %vm900, %v889, %v896
          %v902 = vsel %vm900, %v891, %v897
          %v903 = vsel %vm900, %v893, %v898
          %v904 = vsel %vm900, %v895, %v899
          %909 = vst [vmem:[#allocation5 + $0x20] sm:$0xf] %v901
          %910 = vst [vmem:[#allocation5 + $0x24] sm:$0xf] %v902
          %911 = vst [vmem:[#allocation5 + $0x28] sm:$0xf] %v903
          %912 = vst [vmem:[#allocation5 + $0x2c] sm:$0xf] %v904
          %v913 = vld [vmem:[#allocation4] sm:$0xff]
          %v914 = vld [vmem:[#allocation4 + $0x8] sm:$0xff]
          %v915 = vld [vmem:[#allocation4 + $0x10] sm:$0xff]
          %v916 = vld [vmem:[#allocation4 + $0x18] sm:$0xff]
          %921 = vrot.lane.b32.xlu0 %v913, 111
          %v922 = vpop.permute.xlu0 %921
          %923 = vrot.lane.b32.xlu0 %v914, 111
          %v924 = vpop.permute.xlu0 %923
          %925 = vrot.lane.b32.xlu0 %v915, 111
          %v926 = vpop.permute.xlu0 %925
          %927 = vrot.lane.b32.xlu0 %v916, 111
          %v928 = vpop.permute.xlu0 %927
          %v929 = vrot.slane %v922, 4
          %v930 = vrot.slane %v924, 4
          %v931 = vrot.slane %v926, 4
          %v932 = vrot.slane %v928, 4
          %vm933 = vcmask 908288
          %v934 = vsel %vm933, %v922, %v929
          %v935 = vsel %vm933, %v924, %v930
          %v936 = vsel %vm933, %v926, %v931
          %v937 = vsel %vm933, %v928, %v932
          %942 = vst [vmem:[#allocation5 + $0x30] sm:$0xf] %v934
          %943 = vst [vmem:[#allocation5 + $0x34] sm:$0xf] %v935
          %944 = vst [vmem:[#allocation5 + $0x38] sm:$0xf] %v936
          %945 = vst [vmem:[#allocation5 + $0x3c] sm:$0xf] %v937
          %v946 = vld [vmem:[#allocation4] sm:$0xff]
          %v947 = vld [vmem:[#allocation4 + $0x8] sm:$0xff]
          %v948 = vld [vmem:[#allocation4 + $0x10] sm:$0xff]
          %v949 = vld [vmem:[#allocation4 + $0x18] sm:$0xff]
          %954 = vrot.lane.b32.xlu0 %v946, 110
          %v955 = vpop.permute.xlu0 %954
          %956 = vrot.lane.b32.xlu0 %v947, 110
          %v957 = vpop.permute.xlu0 %956
          %958 = vrot.lane.b32.xlu0 %v948, 110
          %v959 = vpop.permute.xlu0 %958
          %960 = vrot.lane.b32.xlu0 %v949, 110
          %v961 = vpop.permute.xlu0 %960
          %v962 = vrot.slane %v955, 4
          %v963 = vrot.slane %v957, 4
          %v964 = vrot.slane %v959, 4
          %v965 = vrot.slane %v961, 4
          %vm966 = vcmask 900096
          %v967 = vsel %vm966, %v955, %v962
          %v968 = vsel %vm966, %v957, %v963
          %v969 = vsel %vm966, %v959, %v964
          %v970 = vsel %vm966, %v961, %v965
          %975 = vst [vmem:[#allocation5 + $0x40] sm:$0xf] %v967
          %976 = vst [vmem:[#allocation5 + $0x44] sm:$0xf] %v968
          %977 = vst [vmem:[#allocation5 + $0x48] sm:$0xf] %v969
          %978 = vst [vmem:[#allocation5 + $0x4c] sm:$0xf] %v970
        $region76: #{tpu_custom_call.1} parent=67 // pred_fallthru
          _
        %p979 = scmp.eq.s32.totalorder %s48, 1
        // Predicated region
        $region77: #{tpu_custom_call.1} parent=67 // pred_check
          %p980 = pneg %p979
        $region78: #{tpu_custom_call.1} parent=67 // pred_check_branch
          %982 = sbr.rel (%p980) target = $region80
        $region79: #{tpu_custom_call.1} parent=67 // pred_region
          %v983 = vld [vmem:[#allocation4] sm:$0xff]
          %v984 = vld [vmem:[#allocation4 + $0x8] sm:$0xff]
          %v985 = vld [vmem:[#allocation4 + $0x10] sm:$0xff]
          %v986 = vld [vmem:[#allocation4 + $0x18] sm:$0xff]
          %991 = vrot.lane.b32.xlu0 %v983, 116
          %v992 = vpop.permute.xlu0 %991
          %993 = vrot.lane.b32.xlu0 %v984, 116
          %v994 = vpop.permute.xlu0 %993
          %995 = vrot.lane.b32.xlu0 %v985, 116
          %v996 = vpop.permute.xlu0 %995
          %997 = vrot.lane.b32.xlu0 %v986, 116
          %v998 = vpop.permute.xlu0 %997
          %v999 = vrot.slane %v992, 4
          %v1000 = vrot.slane %v994, 4
          %v1001 = vrot.slane %v996, 4
          %v1002 = vrot.slane %v998, 4
          %vm1003 = vcmask 949248
          %v1004 = vsel %vm1003, %v992, %v999
          %v1005 = vsel %vm1003, %v994, %v1000
          %v1006 = vsel %vm1003, %v996, %v1001
          %v1007 = vsel %vm1003, %v998, %v1002
          %1012 = vst [vmem:[#allocation5] sm:$0xf] %v1004
          %1013 = vst [vmem:[#allocation5 + $0x4] sm:$0xf] %v1005
          %1014 = vst [vmem:[#allocation5 + $0x8] sm:$0xf] %v1006
          %1015 = vst [vmem:[#allocation5 + $0xc] sm:$0xf] %v1007
          %v1016 = vld [vmem:[#allocation4] sm:$0xff]
          %v1017 = vld [vmem:[#allocation4 + $0x8] sm:$0xff]
          %v1018 = vld [vmem:[#allocation4 + $0x10] sm:$0xff]
          %v1019 = vld [vmem:[#allocation4 + $0x18] sm:$0xff]
          %1024 = vrot.lane.b32.xlu0 %v1016, 114
          %v1025 = vpop.permute.xlu0 %1024
          %1026 = vrot.lane.b32.xlu0 %v1017, 114
          %v1027 = vpop.permute.xlu0 %1026
          %1028 = vrot.lane.b32.xlu0 %v1018, 114
          %v1029 = vpop.permute.xlu0 %1028
          %1030 = vrot.lane.b32.xlu0 %v1019, 114
          %v1031 = vpop.permute.xlu0 %1030
          %v1032 = vrot.slane %v1025, 4
          %v1033 = vrot.slane %v1027, 4
          %v1034 = vrot.slane %v1029, 4
          %v1035 = vrot.slane %v1031, 4
          %vm1036 = vcmask 932864
          %v1037 = vsel %vm1036, %v1025, %v1032
          %v1038 = vsel %vm1036, %v1027, %v1033
          %v1039 = vsel %vm1036, %v1029, %v1034
          %v1040 = vsel %vm1036, %v1031, %v1035
          %1045 = vst [vmem:[#allocation5 + $0x10] sm:$0xf] %v1037
          %1046 = vst [vmem:[#allocation5 + $0x14] sm:$0xf] %v1038
          %1047 = vst [vmem:[#allocation5 + $0x18] sm:$0xf] %v1039
          %1048 = vst [vmem:[#allocation5 + $0x1c] sm:$0xf] %v1040
          %v1049 = vld [vmem:[#allocation4] sm:$0xff]
          %v1050 = vld [vmem:[#allocation4 + $0x8] sm:$0xff]
          %v1051 = vld [vmem:[#allocation4 + $0x10] sm:$0xff]
          %v1052 = vld [vmem:[#allocation4 + $0x18] sm:$0xff]
          %1057 = vrot.lane.b32.xlu0 %v1049, 112
          %v1058 = vpop.permute.xlu0 %1057
          %1059 = vrot.lane.b32.xlu0 %v1050, 112
          %v1060 = vpop.permute.xlu0 %1059
          %1061 = vrot.lane.b32.xlu0 %v1051, 112
          %v1062 = vpop.permute.xlu0 %1061
          %1063 = vrot.lane.b32.xlu0 %v1052, 112
          %v1064 = vpop.permute.xlu0 %1063
          %v1065 = vrot.slane %v1058, 4
          %v1066 = vrot.slane %v1060, 4
          %v1067 = vrot.slane %v1062, 4
          %v1068 = vrot.slane %v1064, 4
          %vm1069 = vcmask 916480
          %v1070 = vsel %vm1069, %v1058, %v1065
          %v1071 = vsel %vm1069, %v1060, %v1066
          %v1072 = vsel %vm1069, %v1062, %v1067
          %v1073 = vsel %vm1069, %v1064, %v1068
          %1078 = vst [vmem:[#allocation5 + $0x20] sm:$0xf] %v1070
          %1079 = vst [vmem:[#allocation5 + $0x24] sm:$0xf] %v1071
          %1080 = vst [vmem:[#allocation5 + $0x28] sm:$0xf] %v1072
          %1081 = vst [vmem:[#allocation5 + $0x2c] sm:$0xf] %v1073
          %v1082 = vld [vmem:[#allocation4] sm:$0xff]
          %v1083 = vld [vmem:[#allocation4 + $0x8] sm:$0xff]
          %v1084 = vld [vmem:[#allocation4 + $0x10] sm:$0xff]
          %v1085 = vld [vmem:[#allocation4 + $0x18] sm:$0xff]
          %1090 = vrot.lane.b32.xlu0 %v1082, 110
          %v1091 = vpop.permute.xlu0 %1090
          %1092 = vrot.lane.b32.xlu0 %v1083, 110
          %v1093 = vpop.permute.xlu0 %1092
          %1094 = vrot.lane.b32.xlu0 %v1084, 110
          %v1095 = vpop.permute.xlu0 %1094
          %1096 = vrot.lane.b32.xlu0 %v1085, 110
          %v1097 = vpop.permute.xlu0 %1096
          %v1098 = vrot.slane %v1091, 4
          %v1099 = vrot.slane %v1093, 4
          %v1100 = vrot.slane %v1095, 4
          %v1101 = vrot.slane %v1097, 4
          %vm1102 = vcmask 900096
          %v1103 = vsel %vm1102, %v1091, %v1098
          %v1104 = vsel %vm1102, %v1093, %v1099
          %v1105 = vsel %vm1102, %v1095, %v1100
          %v1106 = vsel %vm1102, %v1097, %v1101
          %1111 = vst [vmem:[#allocation5 + $0x30] sm:$0xf] %v1103
          %1112 = vst [vmem:[#allocation5 + $0x34] sm:$0xf] %v1104
          %1113 = vst [vmem:[#allocation5 + $0x38] sm:$0xf] %v1105
          %1114 = vst [vmem:[#allocation5 + $0x3c] sm:$0xf] %v1106
          %v1115 = vld [vmem:[#allocation4] sm:$0xff]
          %v1116 = vld [vmem:[#allocation4 + $0x8] sm:$0xff]
          %v1117 = vld [vmem:[#allocation4 + $0x10] sm:$0xff]
          %v1118 = vld [vmem:[#allocation4 + $0x18] sm:$0xff]
          %1123 = vrot.lane.b32.xlu0 %v1115, 108
          %v1124 = vpop.permute.xlu0 %1123
          %1125 = vrot.lane.b32.xlu0 %v1116, 108
          %v1126 = vpop.permute.xlu0 %1125
          %1127 = vrot.lane.b32.xlu0 %v1117, 108
          %v1128 = vpop.permute.xlu0 %1127
          %1129 = vrot.lane.b32.xlu0 %v1118, 108
          %v1130 = vpop.permute.xlu0 %1129
          %v1131 = vrot.slane %v1124, 4
          %v1132 = vrot.slane %v1126, 4
          %v1133 = vrot.slane %v1128, 4
          %v1134 = vrot.slane %v1130, 4
          %vm1135 = vcmask 883712
          %v1136 = vsel %vm1135, %v1124, %v1131
          %v1137 = vsel %vm1135, %v1126, %v1132
          %v1138 = vsel %vm1135, %v1128, %v1133
          %v1139 = vsel %vm1135, %v1130, %v1134
          %1144 = vst [vmem:[#allocation5 + $0x40] sm:$0xf] %v1136
          %1145 = vst [vmem:[#allocation5 + $0x44] sm:$0xf] %v1137
          %1146 = vst [vmem:[#allocation5 + $0x48] sm:$0xf] %v1138
          %1147 = vst [vmem:[#allocation5 + $0x4c] sm:$0xf] %v1139
        $region80: #{tpu_custom_call.1} parent=67 // pred_fallthru
          _
        %p1148 = scmp.eq.s32.totalorder %s48, 2
        // Predicated region
        $region81: #{tpu_custom_call.1} parent=67 // pred_check
          %p1149 = pneg %p1148
        $region82: #{tpu_custom_call.1} parent=67 // pred_check_branch
          %1151 = sbr.rel (%p1149) target = $region84
        $region83: #{tpu_custom_call.1} parent=67 // pred_region
          %v1152 = vld [vmem:[#allocation4] sm:$0xff]
          %v1153 = vld [vmem:[#allocation4 + $0x8] sm:$0xff]
          %v1154 = vld [vmem:[#allocation4 + $0x10] sm:$0xff]
          %v1155 = vld [vmem:[#allocation4 + $0x18] sm:$0xff]
          %1160 = vrot.lane.b32.xlu0 %v1152, 120
          %v1161 = vpop.permute.xlu0 %1160
          %1162 = vrot.lane.b32.xlu0 %v1153, 120
          %v1163 = vpop.permute.xlu0 %1162
          %1164 = vrot.lane.b32.xlu0 %v1154, 120
          %v1165 = vpop.permute.xlu0 %1164
          %1166 = vrot.lane.b32.xlu0 %v1155, 120
          %v1167 = vpop.permute.xlu0 %1166
          %v1168 = vrot.slane %v1161, 4
          %v1169 = vrot.slane %v1163, 4
          %v1170 = vrot.slane %v1165, 4
          %v1171 = vrot.slane %v1167, 4
          %vm1172 = vcmask 982016
          %v1173 = vsel %vm1172, %v1161, %v1168
          %v1174 = vsel %vm1172, %v1163, %v1169
          %v1175 = vsel %vm1172, %v1165, %v1170
          %v1176 = vsel %vm1172, %v1167, %v1171
          %1181 = vst [vmem:[#allocation5] sm:$0xf] %v1173
          %1182 = vst [vmem:[#allocation5 + $0x4] sm:$0xf] %v1174
          %1183 = vst [vmem:[#allocation5 + $0x8] sm:$0xf] %v1175
          %1184 = vst [vmem:[#allocation5 + $0xc] sm:$0xf] %v1176
          %v1185 = vld [vmem:[#allocation4] sm:$0xff]
          %v1186 = vld [vmem:[#allocation4 + $0x8] sm:$0xff]
          %v1187 = vld [vmem:[#allocation4 + $0x10] sm:$0xff]
          %v1188 = vld [vmem:[#allocation4 + $0x18] sm:$0xff]
          %1193 = vrot.lane.b32.xlu0 %v1185, 116
          %v1194 = vpop.permute.xlu0 %1193
          %1195 = vrot.lane.b32.xlu0 %v1186, 116
          %v1196 = vpop.permute.xlu0 %1195
          %1197 = vrot.lane.b32.xlu0 %v1187, 116
          %v1198 = vpop.permute.xlu0 %1197
          %1199 = vrot.lane.b32.xlu0 %v1188, 116
          %v1200 = vpop.permute.xlu0 %1199
          %v1201 = vrot.slane %v1194, 4
          %v1202 = vrot.slane %v1196, 4
          %v1203 = vrot.slane %v1198, 4
          %v1204 = vrot.slane %v1200, 4
          %vm1205 = vcmask 949248
          %v1206 = vsel %vm1205, %v1194, %v1201
          %v1207 = vsel %vm1205, %v1196, %v1202
          %v1208 = vsel %vm1205, %v1198, %v1203
          %v1209 = vsel %vm1205, %v1200, %v1204
          %1214 = vst [vmem:[#allocation5 + $0x10] sm:$0xf] %v1206
          %1215 = vst [vmem:[#allocation5 + $0x14] sm:$0xf] %v1207
          %1216 = vst [vmem:[#allocation5 + $0x18] sm:$0xf] %v1208
          %1217 = vst [vmem:[#allocation5 + $0x1c] sm:$0xf] %v1209
          %v1218 = vld [vmem:[#allocation4] sm:$0xff]
          %v1219 = vld [vmem:[#allocation4 + $0x8] sm:$0xff]
          %v1220 = vld [vmem:[#allocation4 + $0x10] sm:$0xff]
          %v1221 = vld [vmem:[#allocation4 + $0x18] sm:$0xff]
          %1226 = vrot.lane.b32.xlu0 %v1218, 112
          %v1227 = vpop.permute.xlu0 %1226
          %1228 = vrot.lane.b32.xlu0 %v1219, 112
          %v1229 = vpop.permute.xlu0 %1228
          %1230 = vrot.lane.b32.xlu0 %v1220, 112
          %v1231 = vpop.permute.xlu0 %1230
          %1232 = vrot.lane.b32.xlu0 %v1221, 112
          %v1233 = vpop.permute.xlu0 %1232
          %v1234 = vrot.slane %v1227, 4
          %v1235 = vrot.slane %v1229, 4
          %v1236 = vrot.slane %v1231, 4
          %v1237 = vrot.slane %v1233, 4
          %vm1238 = vcmask 916480
          %v1239 = vsel %vm1238, %v1227, %v1234
          %v1240 = vsel %vm1238, %v1229, %v1235
          %v1241 = vsel %vm1238, %v1231, %v1236
          %v1242 = vsel %vm1238, %v1233, %v1237
          %1247 = vst [vmem:[#allocation5 + $0x20] sm:$0xf] %v1239
          %1248 = vst [vmem:[#allocation5 + $0x24] sm:$0xf] %v1240
          %1249 = vst [vmem:[#allocation5 + $0x28] sm:$0xf] %v1241
          %1250 = vst [vmem:[#allocation5 + $0x2c] sm:$0xf] %v1242
          %v1251 = vld [vmem:[#allocation4] sm:$0xff]
          %v1252 = vld [vmem:[#allocation4 + $0x8] sm:$0xff]
          %v1253 = vld [vmem:[#allocation4 + $0x10] sm:$0xff]
          %v1254 = vld [vmem:[#allocation4 + $0x18] sm:$0xff]
          %1259 = vrot.lane.b32.xlu0 %v1251, 108
          %v1260 = vpop.permute.xlu0 %1259
          %1261 = vrot.lane.b32.xlu0 %v1252, 108
          %v1262 = vpop.permute.xlu0 %1261
          %1263 = vrot.lane.b32.xlu0 %v1253, 108
          %v1264 = vpop.permute.xlu0 %1263
          %1265 = vrot.lane.b32.xlu0 %v1254, 108
          %v1266 = vpop.permute.xlu0 %1265
          %v1267 = vrot.slane %v1260, 4
          %v1268 = vrot.slane %v1262, 4
          %v1269 = vrot.slane %v1264, 4
          %v1270 = vrot.slane %v1266, 4
          %vm1271 = vcmask 883712
          %v1272 = vsel %vm1271, %v1260, %v1267
          %v1273 = vsel %vm1271, %v1262, %v1268
          %v1274 = vsel %vm1271, %v1264, %v1269
          %v1275 = vsel %vm1271, %v1266, %v1270
          %1280 = vst [vmem:[#allocation5 + $0x30] sm:$0xf] %v1272
          %1281 = vst [vmem:[#allocation5 + $0x34] sm:$0xf] %v1273
          %1282 = vst [vmem:[#allocation5 + $0x38] sm:$0xf] %v1274
          %1283 = vst [vmem:[#allocation5 + $0x3c] sm:$0xf] %v1275
          %v1284 = vld [vmem:[#allocation4] sm:$0xff]
          %v1285 = vld [vmem:[#allocation4 + $0x8] sm:$0xff]
          %v1286 = vld [vmem:[#allocation4 + $0x10] sm:$0xff]
          %v1287 = vld [vmem:[#allocation4 + $0x18] sm:$0xff]
          %1292 = vrot.lane.b32.xlu0 %v1284, 104
          %v1293 = vpop.permute.xlu0 %1292
          %1294 = vrot.lane.b32.xlu0 %v1285, 104
          %v1295 = vpop.permute.xlu0 %1294
          %1296 = vrot.lane.b32.xlu0 %v1286, 104
          %v1297 = vpop.permute.xlu0 %1296
          %1298 = vrot.lane.b32.xlu0 %v1287, 104
          %v1299 = vpop.permute.xlu0 %1298
          %v1300 = vrot.slane %v1293, 4
          %v1301 = vrot.slane %v1295, 4
          %v1302 = vrot.slane %v1297, 4
          %v1303 = vrot.slane %v1299, 4
          %vm1304 = vcmask 850944
          %v1305 = vsel %vm1304, %v1293, %v1300
          %v1306 = vsel %vm1304, %v1295, %v1301
          %v1307 = vsel %vm1304, %v1297, %v1302
          %v1308 = vsel %vm1304, %v1299, %v1303
          %1313 = vst [vmem:[#allocation5 + $0x40] sm:$0xf] %v1305
          %1314 = vst [vmem:[#allocation5 + $0x44] sm:$0xf] %v1306
          %1315 = vst [vmem:[#allocation5 + $0x48] sm:$0xf] %v1307
          %1316 = vst [vmem:[#allocation5 + $0x4c] sm:$0xf] %v1308
        $region84: #{tpu_custom_call.1} parent=67 // pred_fallthru
          _
        %p1317 = scmp.eq.s32.totalorder %s48, 3
        // Predicated region
        $region85: #{tpu_custom_call.1} parent=67 // pred_check
          %p1318 = pneg %p1317
        $region86: #{tpu_custom_call.1} parent=67 // pred_check_branch
          %1320 = sbr.rel (%p1318) target = $region88
        $region87: #{tpu_custom_call.1} parent=67 // pred_region
          %v1321 = vld [vmem:[#allocation4] sm:$0xf]
          %v1322 = vld [vmem:[#allocation4 + $0x8] sm:$0xf]
          %v1323 = vld [vmem:[#allocation4 + $0x10] sm:$0xf]
          %v1324 = vld [vmem:[#allocation4 + $0x18] sm:$0xf]
          %1325 = vst [vmem:[#allocation5] sm:$0xf] %v1321
          %1326 = vst [vmem:[#allocation5 + $0x4] sm:$0xf] %v1322
          %1327 = vst [vmem:[#allocation5 + $0x8] sm:$0xf] %v1323
          %1328 = vst [vmem:[#allocation5 + $0xc] sm:$0xf] %v1324
          %v1329 = vld [vmem:[#allocation4] sm:$0xff]
          %v1330 = vld [vmem:[#allocation4 + $0x8] sm:$0xff]
          %v1331 = vld [vmem:[#allocation4 + $0x10] sm:$0xff]
          %v1332 = vld [vmem:[#allocation4 + $0x18] sm:$0xff]
          %1337 = vrot.lane.b32.xlu0 %v1329, 120
          %v1338 = vpop.permute.xlu0 %1337
          %1339 = vrot.lane.b32.xlu0 %v1330, 120
          %v1340 = vpop.permute.xlu0 %1339
          %1341 = vrot.lane.b32.xlu0 %v1331, 120
          %v1342 = vpop.permute.xlu0 %1341
          %1343 = vrot.lane.b32.xlu0 %v1332, 120
          %v1344 = vpop.permute.xlu0 %1343
          %v1345 = vrot.slane %v1338, 4
          %v1346 = vrot.slane %v1340, 4
          %v1347 = vrot.slane %v1342, 4
          %v1348 = vrot.slane %v1344, 4
          %vm1349 = vcmask 982016
          %v1350 = vsel %vm1349, %v1338, %v1345
          %v1351 = vsel %vm1349, %v1340, %v1346
          %v1352 = vsel %vm1349, %v1342, %v1347
          %v1353 = vsel %vm1349, %v1344, %v1348
          %1358 = vst [vmem:[#allocation5 + $0x10] sm:$0xf] %v1350
          %1359 = vst [vmem:[#allocation5 + $0x14] sm:$0xf] %v1351
          %1360 = vst [vmem:[#allocation5 + $0x18] sm:$0xf] %v1352
          %1361 = vst [vmem:[#allocation5 + $0x1c] sm:$0xf] %v1353
          %v1362 = vld [vmem:[#allocation4] sm:$0xff]
          %v1363 = vld [vmem:[#allocation4 + $0x8] sm:$0xff]
          %v1364 = vld [vmem:[#allocation4 + $0x10] sm:$0xff]
          %v1365 = vld [vmem:[#allocation4 + $0x18] sm:$0xff]
          %1370 = vrot.lane.b32.xlu0 %v1362, 112
          %v1371 = vpop.permute.xlu0 %1370
          %1372 = vrot.lane.b32.xlu0 %v1363, 112
          %v1373 = vpop.permute.xlu0 %1372
          %1374 = vrot.lane.b32.xlu0 %v1364, 112
          %v1375 = vpop.permute.xlu0 %1374
          %1376 = vrot.lane.b32.xlu0 %v1365, 112
          %v1377 = vpop.permute.xlu0 %1376
          %v1378 = vrot.slane %v1371, 4
          %v1379 = vrot.slane %v1373, 4
          %v1380 = vrot.slane %v1375, 4
          %v1381 = vrot.slane %v1377, 4
          %vm1382 = vcmask 916480
          %v1383 = vsel %vm1382, %v1371, %v1378
          %v1384 = vsel %vm1382, %v1373, %v1379
          %v1385 = vsel %vm1382, %v1375, %v1380
          %v1386 = vsel %vm1382, %v1377, %v1381
          %1391 = vst [vmem:[#allocation5 + $0x20] sm:$0xf] %v1383
          %1392 = vst [vmem:[#allocation5 + $0x24] sm:$0xf] %v1384
          %1393 = vst [vmem:[#allocation5 + $0x28] sm:$0xf] %v1385
          %1394 = vst [vmem:[#allocation5 + $0x2c] sm:$0xf] %v1386
          %v1395 = vld [vmem:[#allocation4] sm:$0xff]
          %v1396 = vld [vmem:[#allocation4 + $0x8] sm:$0xff]
          %v1397 = vld [vmem:[#allocation4 + $0x10] sm:$0xff]
          %v1398 = vld [vmem:[#allocation4 + $0x18] sm:$0xff]
          %1403 = vrot.lane.b32.xlu0 %v1395, 104
          %v1404 = vpop.permute.xlu0 %1403
          %1405 = vrot.lane.b32.xlu0 %v1396, 104
          %v1406 = vpop.permute.xlu0 %1405
          %1407 = vrot.lane.b32.xlu0 %v1397, 104
          %v1408 = vpop.permute.xlu0 %1407
          %1409 = vrot.lane.b32.xlu0 %v1398, 104
          %v1410 = vpop.permute.xlu0 %1409
          %v1411 = vrot.slane %v1404, 4
          %v1412 = vrot.slane %v1406, 4
          %v1413 = vrot.slane %v1408, 4
          %v1414 = vrot.slane %v1410, 4
          %vm1415 = vcmask 850944
          %v1416 = vsel %vm1415, %v1404, %v1411
          %v1417 = vsel %vm1415, %v1406, %v1412
          %v1418 = vsel %vm1415, %v1408, %v1413
          %v1419 = vsel %vm1415, %v1410, %v1414
          %1424 = vst [vmem:[#allocation5 + $0x30] sm:$0xf] %v1416
          %1425 = vst [vmem:[#allocation5 + $0x34] sm:$0xf] %v1417
          %1426 = vst [vmem:[#allocation5 + $0x38] sm:$0xf] %v1418
          %1427 = vst [vmem:[#allocation5 + $0x3c] sm:$0xf] %v1419
          %v1428 = vld [vmem:[#allocation4] sm:$0xff]
          %v1429 = vld [vmem:[#allocation4 + $0x8] sm:$0xff]
          %v1430 = vld [vmem:[#allocation4 + $0x10] sm:$0xff]
          %v1431 = vld [vmem:[#allocation4 + $0x18] sm:$0xff]
          %1436 = vrot.lane.b32.xlu0 %v1428, 96
          %v1437 = vpop.permute.xlu0 %1436
          %1438 = vrot.lane.b32.xlu0 %v1429, 96
          %v1439 = vpop.permute.xlu0 %1438
          %1440 = vrot.lane.b32.xlu0 %v1430, 96
          %v1441 = vpop.permute.xlu0 %1440
          %1442 = vrot.lane.b32.xlu0 %v1431, 96
          %v1443 = vpop.permute.xlu0 %1442
          %v1444 = vrot.slane %v1437, 4
          %v1445 = vrot.slane %v1439, 4
          %v1446 = vrot.slane %v1441, 4
          %v1447 = vrot.slane %v1443, 4
          %vm1448 = vcmask 785408
          %v1449 = vsel %vm1448, %v1437, %v1444
          %v1450 = vsel %vm1448, %v1439, %v1445
          %v1451 = vsel %vm1448, %v1441, %v1446
          %v1452 = vsel %vm1448, %v1443, %v1447
          %1457 = vst [vmem:[#allocation5 + $0x40] sm:$0xf] %v1449
          %1458 = vst [vmem:[#allocation5 + $0x44] sm:$0xf] %v1450
          %1459 = vst [vmem:[#allocation5 + $0x48] sm:$0xf] %v1451
          %1460 = vst [vmem:[#allocation5 + $0x4c] sm:$0xf] %v1452
        $region88: #{tpu_custom_call.1} parent=67 // pred_fallthru
          _
        %v1461 = vld [vmem:[%s617] sm:$0xff]
        %v1462 = vld [vmem:[%s617 + $0x8] sm:$0xff]
        %v1463 = vld [vmem:[%s617 + $0x10] sm:$0xff]
        %v1464 = vld [vmem:[%s617 + $0x18] sm:$0xff]
        %v1465 = vld [vmem:[%s617 + $0x20] sm:$0xff]
        %v1466 = vld [vmem:[%s617 + $0x28] sm:$0xff]
        %v1467 = vld [vmem:[%s617 + $0x30] sm:$0xff]
        %v1468 = vld [vmem:[%s617 + $0x38] sm:$0xff]
        %v1469 = vld [vmem:[#allocation5] sm:$0xf]
        %v1470 = vld [vmem:[#allocation5 + $0x4] sm:$0xf]
        %v1471 = vld [vmem:[#allocation5 + $0x8] sm:$0xf]
        %v1472 = vld [vmem:[#allocation5 + $0xc] sm:$0xf]
        %v1473 = vld [vmem:[#allocation5 + $0x10] sm:$0xf]
        %v1474 = vld [vmem:[#allocation5 + $0x14] sm:$0xf]
        %v1475 = vld [vmem:[#allocation5 + $0x18] sm:$0xf]
        %v1476 = vld [vmem:[#allocation5 + $0x1c] sm:$0xf]
        %v1477 = vld [vmem:[#allocation5 + $0x20] sm:$0xf]
        %v1478 = vld [vmem:[#allocation5 + $0x24] sm:$0xf]
        %v1479 = vld [vmem:[#allocation5 + $0x28] sm:$0xf]
        %v1480 = vld [vmem:[#allocation5 + $0x2c] sm:$0xf]
        %v1481 = vld [vmem:[#allocation5 + $0x30] sm:$0xf]
        %v1482 = vld [vmem:[#allocation5 + $0x34] sm:$0xf]
        %v1483 = vld [vmem:[#allocation5 + $0x38] sm:$0xf]
        %v1484 = vld [vmem:[#allocation5 + $0x3c] sm:$0xf]
        %v1485 = vld [vmem:[#allocation5 + $0x40] sm:$0xf]
        %v1486 = vld [vmem:[#allocation5 + $0x44] sm:$0xf]
        %v1487 = vld [vmem:[#allocation5 + $0x48] sm:$0xf]
        %v1488 = vld [vmem:[#allocation5 + $0x4c] sm:$0xf]
        %v1489 = vld [vmem:[%s622] sm:$0xff]
        %v1490 = vld [vmem:[%s622 + $0x8] sm:$0xff]
        %v1491 = vld [vmem:[%s622 + $0x10] sm:$0xff]
        %v1492 = vld [vmem:[%s622 + $0x18] sm:$0xff]
        %v1493 = vld [vmem:[%s622 + $0x20] sm:$0xff]
        %v1494 = vld [vmem:[%s622 + $0x28] sm:$0xff]
        %v1495 = vld [vmem:[%s622 + $0x30] sm:$0xff]
        %v1496 = vld [vmem:[%s622 + $0x38] sm:$0xff]
        %1498 = vset.pattern.permute.xlu0 0
        %1499 = vperm.xlu0 %1498, %v1489
        %v1500 = vpop.permute.xlu0 %1499
        %1503 = vset.pattern.permute.xlu0 0
        %1504 = vperm.xlu0 %1503, %v1490
        %v1505 = vpop.permute.xlu0 %1504
        %1508 = vset.pattern.permute.xlu0 0
        %1509 = vperm.xlu0 %1508, %v1491
        %v1510 = vpop.permute.xlu0 %1509
        %1513 = vset.pattern.permute.xlu0 0
        %1514 = vperm.xlu0 %1513, %v1492
        %v1515 = vpop.permute.xlu0 %1514
        %1518 = vset.pattern.permute.xlu0 0
        %1519 = vperm.xlu0 %1518, %v1493
        %v1520 = vpop.permute.xlu0 %1519
        %1523 = vset.pattern.permute.xlu0 0
        %1524 = vperm.xlu0 %1523, %v1494
        %v1525 = vpop.permute.xlu0 %1524
        %1528 = vset.pattern.permute.xlu0 0
        %1529 = vperm.xlu0 %1528, %v1495
        %v1530 = vpop.permute.xlu0 %1529
        %1533 = vset.pattern.permute.xlu0 0
        %1534 = vperm.xlu0 %1533, %v1496
        %v1535 = vpop.permute.xlu0 %1534
        %v1545 = vunpack.c.l.b16 %v1461
        %v1546 = vunpack.c.h.b16 %v1461
        %v1547 = vunpack.c.l.b16 %v1462
        %v1548 = vunpack.c.h.b16 %v1462
        %v1549 = vunpack.c.l.b16 %v1463
        %v1550 = vunpack.c.h.b16 %v1463
        %v1551 = vunpack.c.l.b16 %v1464
        %v1552 = vunpack.c.h.b16 %v1464
        %v1553 = vunpack.c.l.b16 %v1465
        %v1554 = vunpack.c.h.b16 %v1465
        %v1555 = vunpack.c.l.b16 %v1466
        %v1556 = vunpack.c.h.b16 %v1466
        %v1557 = vunpack.c.l.b16 %v1467
        %v1558 = vunpack.c.h.b16 %v1467
        %v1559 = vunpack.c.l.b16 %v1468
        %v1560 = vunpack.c.h.b16 %v1468
        %v1561 = vpack.c.b16 %v1547, %v1545
        %v1562 = vpack.c.b16 %v1548, %v1546
        %v1563 = vpack.c.b16 %v1551, %v1549
        %v1564 = vpack.c.b16 %v1552, %v1550
        %v1565 = vpack.c.b16 %v1555, %v1553
        %v1566 = vpack.c.b16 %v1556, %v1554
        %v1567 = vpack.c.b16 %v1559, %v1557
        %v1568 = vpack.c.b16 %v1560, %v1558
        %v1593 = vunpack.c.l.b16 %v1469
        %v1594 = vunpack.c.l.b16 %v1470
        %v1595 = vunpack.c.l.b16 %v1471
        %v1596 = vunpack.c.l.b16 %v1472
        %v1597 = vunpack.c.l.b16 %v1473
        %v1598 = vunpack.c.l.b16 %v1474
        %v1599 = vunpack.c.l.b16 %v1475
        %v1600 = vunpack.c.l.b16 %v1476
        %v1601 = vunpack.c.l.b16 %v1477
        %v1602 = vunpack.c.l.b16 %v1478
        %v1603 = vunpack.c.l.b16 %v1479
        %v1604 = vunpack.c.l.b16 %v1480
        %v1605 = vunpack.c.l.b16 %v1481
        %v1606 = vunpack.c.l.b16 %v1482
        %v1607 = vunpack.c.l.b16 %v1483
        %v1608 = vunpack.c.l.b16 %v1484
        %v1609 = vunpack.c.l.b16 %v1485
        %v1610 = vunpack.c.l.b16 %v1486
        %v1611 = vunpack.c.l.b16 %v1487
        %v1612 = vunpack.c.l.b16 %v1488
        %v1613 = vpack.c.b16 %v1594, %v1593
        %v1614 = vpack.c.b16 %v1596, %v1595
        %v1615 = vpack.c.b16 %v1598, %v1597
        %v1616 = vpack.c.b16 %v1600, %v1599
        %v1617 = vpack.c.b16 %v1602, %v1601
        %v1618 = vpack.c.b16 %v1604, %v1603
        %v1619 = vpack.c.b16 %v1606, %v1605
        %v1620 = vpack.c.b16 %v1608, %v1607
        %v1621 = vpack.c.b16 %v1610, %v1609
        %v1622 = vpack.c.b16 %v1612, %v1611
        %vm1633 = vcmask 261120
        %v1635 = vsel %vm1633, %v1562, 0
        %v1638 = vsel %vm1633, %v1564, 0
        %v1641 = vsel %vm1633, %v1566, 0
        %v1644 = vsel %vm1633, %v1568, 0
        %1646 = vmatprep.subr.bf16.mxu0 0
        %1647 = vmatpush1.bf16.msra.mxu0 %v1620
        %1648 = vmatprep.subr.bf16.mxu0 0
        %1649 = vmatpush1.bf16.msra.mxu0 %v1619
        %1650 = vmatprep.subr.bf16.mxu0 0
        %1651 = vmatpush1.bf16.msra.mxu0 %v1618
        %1652 = vmatprep.subr.bf16.mxu0 0
        %1653 = vmatpush1.bf16.msra.mxu0 %v1617
        %1654 = vmatprep.subr.bf16.mxu0 0
        %1655 = vmatpush1.bf16.msra.mxu0 %v1616
        %1656 = vmatprep.subr.bf16.mxu0 0
        %1657 = vmatpush1.bf16.msra.mxu0 %v1615
        %1658 = vmatprep.subr.bf16.mxu0 0
        %1659 = vmatpush1.bf16.msra.mxu0 %v1614
        %1660 = vmatprep.subr.bf16.mxu0 0
        %1661 = vmatpush1.bf16.msra.mxu0 %v1613
        %1662 = vmatprep.subr.bf16.mxu0 0
        %1663 = vmatpush2.bf16.msra.mxu0 0
        %1664 = vmatprep.subr.bf16.mxu0 0
        %1665 = vmatpush2.bf16.msra.mxu0 0
        %1666 = vmatprep.subr.bf16.mxu0 0
        %1667 = vmatpush2.bf16.msra.mxu0 0
        %1668 = vmatprep.subr.bf16.mxu0 0
        %1669 = vmatpush2.bf16.msra.mxu0 0
        %1670 = vmatprep.subr.bf16.mxu0 0
        %1671 = vmatpush2.bf16.msra.mxu0 0
        %1672 = vmatprep.subr.bf16.mxu0 0
        %1673 = vmatpush2.bf16.msra.mxu0 0
        %1674 = vmatprep.subr.bf16.mxu0 0
        %1675 = vmatpush2.bf16.msra.mxu0 %v1622
        %1676 = vmatprep.subr.bf16.mxu0 0
        %1677 = vmatpush2.bf16.msra.mxu0 %v1621
        %1678 = vmatprep.mubr.bf16.mxu0 %v1635
        %1679 = vmatmul.mubr.bf16.gmra.mxu0 %v1561
        %v1680 = vpop.f32.mrf.mxu0
        %v1681 = vadd.f32 %v1500, %v1680
        %v1682 = vpop.f32.mrf.mxu0
        %v1683 = vpop.f32.mrf.mxu0
        %v1684 = vadd.f32 %v1505, %v1683
        %v1685 = vpop.f32.mrf.mxu0
        %1686 = vmatprep.mubr.bf16.mxu0 %v1638
        %1687 = vmatmul.mubr.bf16.gmra.mxu0 %v1563
        %v1688 = vpop.f32.mrf.mxu0
        %v1689 = vadd.f32 %v1510, %v1688
        %v1690 = vpop.f32.mrf.mxu0
        %v1691 = vpop.f32.mrf.mxu0
        %v1692 = vadd.f32 %v1515, %v1691
        %v1693 = vpop.f32.mrf.mxu0
        %1694 = vmatprep.mubr.bf16.mxu0 %v1641
        %1695 = vmatmul.mubr.bf16.gmra.mxu0 %v1565
        %v1696 = vpop.f32.mrf.mxu0
        %v1697 = vadd.f32 %v1520, %v1696
        %v1698 = vpop.f32.mrf.mxu0
        %v1699 = vpop.f32.mrf.mxu0
        %v1700 = vadd.f32 %v1525, %v1699
        %v1701 = vpop.f32.mrf.mxu0
        %1702 = vmatprep.mubr.bf16.mxu0 %v1644
        %1703 = vmatmul.mubr.bf16.gmra.mxu0 %v1567
        %v1704 = vpop.f32.mrf.mxu0
        %v1705 = vadd.f32 %v1530, %v1704
        %v1706 = vpop.f32.mrf.mxu0
        %v1707 = vpop.f32.mrf.mxu0
        %v1708 = vadd.f32 %v1535, %v1707
        %v1709 = vpop.f32.mrf.mxu0
        %1710 = vdwg.mxu0
        %v1711 = vtanh.pop %v1681
        %v1712 = vtanh.pop %v1684
        %v1713 = vtanh.pop %v1689
        %v1714 = vtanh.pop %v1692
        %v1715 = vxor.u32 %v1697, 2147483648
        %v1716 = vxor.u32 %v1700, 2147483648
        %v1717 = vxor.u32 %v1705, 2147483648
        %v1718 = vxor.u32 %v1708, 2147483648
        %v1719 = vmul.f32 %v1715, 1.442695
        %v1720 = vpow.pop %v1719
        %v1721 = vmul.f32 %v1716, 1.442695
        %v1722 = vpow.pop %v1721
        %v1723 = vmul.f32 %v1717, 1.442695
        %v1724 = vpow.pop %v1723
        %v1725 = vmul.f32 %v1718, 1.442695
        %v1726 = vpow.pop %v1725
        %v1727 = vadd.f32 %v1720, 1.0
        %v1728 = vadd.f32 %v1722, 1.0
        %v1729 = vadd.f32 %v1724, 1.0
        %v1730 = vadd.f32 %v1726, 1.0
        %v1731 = vrcp.pop %v1727
        %v1732 = vmul.f32 1.0, %v1731
        %v1733 = vrcp.pop %v1728
        %v1734 = vmul.f32 1.0, %v1733
        %v1735 = vrcp.pop %v1729
        %v1736 = vmul.f32 1.0, %v1735
        %v1737 = vrcp.pop %v1730
        %v1738 = vmul.f32 1.0, %v1737
        %v1739 = vmul.f32 %v1711, %v1732
        %v1740 = vmul.f32 %v1712, %v1734
        %v1741 = vmul.f32 %v1713, %v1736
        %v1742 = vmul.f32 %v1714, %v1738
        %v1743 = vpack.c.bf16 %v1740, %v1739
        %v1744 = vpack.c.bf16 %v1742, %v1741
        %p1745 = scmp.lt.s32.totalorder %s48, 3
        // Predicated region
        $region89: #{tpu_custom_call.1} parent=67 // pred_check
          %p1746 = pneg %p1745
        $region90: #{tpu_custom_call.1} parent=67 // pred_check_branch
          %1748 = sbr.rel (%p1746) target = $region92
        $region91: #{tpu_custom_call.1} parent=67 // pred_region
          %v1749 = vld [vmem:[%s627] sm:$0xf]
          %v1750 = vld [vmem:[%s627 + $0x4] sm:$0xf]
          %v1751 = vld [vmem:[%s627 + $0x8] sm:$0xf]
          %v1752 = vld [vmem:[%s627 + $0xc] sm:$0xf]
          %v1753 = vld [vmem:[%s627 + $0x10] sm:$0xf]
          %v1754 = vld [vmem:[%s627 + $0x14] sm:$0xf]
          %v1755 = vld [vmem:[%s627 + $0x18] sm:$0xf]
          %v1756 = vld [vmem:[%s627 + $0x1c] sm:$0xf]
          %v1757 = vld [vmem:[%s632] sm:$0xff]
          %v1758 = vld [vmem:[%s632 + $0x8] sm:$0xff]
          %v1759 = vld [vmem:[%s632 + $0x10] sm:$0xff]
          %v1760 = vld [vmem:[%s632 + $0x18] sm:$0xff]
          %v1761 = vld [vmem:[%s632 + $0x20] sm:$0xff]
          %v1762 = vld [vmem:[%s632 + $0x28] sm:$0xff]
          %v1763 = vld [vmem:[%s632 + $0x30] sm:$0xff]
          %v1764 = vld [vmem:[%s632 + $0x38] sm:$0xff]
          %1766 = vset.pattern.permute.xlu0 0
          %1767 = vperm.xlu0 %1766, %v1757
          %v1768 = vpop.permute.xlu0 %1767
          %1771 = vset.pattern.permute.xlu0 0
          %1772 = vperm.xlu0 %1771, %v1758
          %v1773 = vpop.permute.xlu0 %1772
          %1776 = vset.pattern.permute.xlu0 0
          %1777 = vperm.xlu0 %1776, %v1759
          %v1778 = vpop.permute.xlu0 %1777
          %1781 = vset.pattern.permute.xlu0 0
          %1782 = vperm.xlu0 %1781, %v1760
          %v1783 = vpop.permute.xlu0 %1782
          %1786 = vset.pattern.permute.xlu0 0
          %1787 = vperm.xlu0 %1786, %v1761
          %v1788 = vpop.permute.xlu0 %1787
          %1791 = vset.pattern.permute.xlu0 0
          %1792 = vperm.xlu0 %1791, %v1762
          %v1793 = vpop.permute.xlu0 %1792
          %1796 = vset.pattern.permute.xlu0 0
          %1797 = vperm.xlu0 %1796, %v1763
          %v1798 = vpop.permute.xlu0 %1797
          %1801 = vset.pattern.permute.xlu0 0
          %1802 = vperm.xlu0 %1801, %v1764
          %v1803 = vpop.permute.xlu0 %1802
          %v1813 = vunpack.c.l.b16 %v1749
          %v1814 = vunpack.c.l.b16 %v1750
          %v1815 = vunpack.c.l.b16 %v1751
          %v1816 = vunpack.c.l.b16 %v1752
          %v1817 = vunpack.c.l.b16 %v1753
          %v1818 = vunpack.c.l.b16 %v1754
          %v1819 = vunpack.c.l.b16 %v1755
          %v1820 = vunpack.c.l.b16 %v1756
          %v1821 = vpack.c.b16 %v1814, %v1813
          %v1822 = vpack.c.b16 %v1816, %v1815
          %v1823 = vpack.c.b16 %v1818, %v1817
          %v1824 = vpack.c.b16 %v1820, %v1819
          %v1826 = vsel %vm1633, %v1821, 0
          %v1829 = vsel %vm1633, %v1822, 0
          %v1832 = vsel %vm1633, %v1823, 0
          %v1835 = vsel %vm1633, %v1824, 0
          %1837 = vmatprep.subr.bf16.mxu0 0
          %1838 = vmatpush1.bf16.msra.mxu0 0
          %1839 = vmatprep.subr.bf16.mxu0 0
          %1840 = vmatpush1.bf16.msra.mxu0 0
          %1841 = vmatprep.subr.bf16.mxu0 0
          %1842 = vmatpush1.bf16.msra.mxu0 0
          %1843 = vmatprep.subr.bf16.mxu0 0
          %1844 = vmatpush1.bf16.msra.mxu0 0
          %1845 = vmatprep.subr.bf16.mxu0 0
          %1846 = vmatpush1.bf16.msra.mxu0 0
          %1847 = vmatprep.subr.bf16.mxu0 0
          %1848 = vmatpush1.bf16.msra.mxu0 0
          %1849 = vmatprep.subr.bf16.mxu0 0
          %1850 = vmatpush1.bf16.msra.mxu0 %v1744
          %1851 = vmatprep.subr.bf16.mxu0 0
          %1852 = vmatpush1.bf16.msra.mxu0 %v1743
          %1853 = vmatprep.subr.bf16.mxu0 0
          %1854 = vmatpush2.bf16.msra.mxu0 0
          %1855 = vmatprep.subr.bf16.mxu0 0
          %1856 = vmatpush2.bf16.msra.mxu0 0
          %1857 = vmatprep.subr.bf16.mxu0 0
          %1858 = vmatpush2.bf16.msra.mxu0 0
          %1859 = vmatprep.subr.bf16.mxu0 0
          %1860 = vmatpush2.bf16.msra.mxu0 0
          %1861 = vmatprep.subr.bf16.mxu0 0
          %1862 = vmatpush2.bf16.msra.mxu0 0
          %1863 = vmatprep.subr.bf16.mxu0 0
          %1864 = vmatpush2.bf16.msra.mxu0 0
          %1865 = vmatprep.subr.bf16.mxu0 0
          %1866 = vmatpush2.bf16.msra.mxu0 0
          %1867 = vmatprep.subr.bf16.mxu0 0
          %1868 = vmatpush2.bf16.msra.mxu0 0
          %1869 = vmatprep.mubr.bf16.mxu0 0
          %1870 = vmatmul.mubr.bf16.gmra.mxu0 %v1826
          %v1871 = vpop.f32.mrf.mxu0
          %v1872 = vadd.f32 %v1768, %v1871
          %v1873 = vpop.f32.mrf.mxu0
          %v1874 = vpop.f32.mrf.mxu0
          %v1875 = vadd.f32 %v1773, %v1874
          %v1876 = vpop.f32.mrf.mxu0
          %1877 = vmatprep.mubr.bf16.mxu0 0
          %1878 = vmatmul.mubr.bf16.gmra.mxu0 %v1829
          %v1879 = vpop.f32.mrf.mxu0
          %v1880 = vadd.f32 %v1778, %v1879
          %v1881 = vpop.f32.mrf.mxu0
          %v1882 = vpop.f32.mrf.mxu0
          %v1883 = vadd.f32 %v1783, %v1882
          %v1884 = vpop.f32.mrf.mxu0
          %1885 = vmatprep.mubr.bf16.mxu0 0
          %1886 = vmatmul.mubr.bf16.gmra.mxu0 %v1832
          %v1887 = vpop.f32.mrf.mxu0
          %v1888 = vadd.f32 %v1788, %v1887
          %v1889 = vpop.f32.mrf.mxu0
          %v1890 = vpop.f32.mrf.mxu0
          %v1891 = vadd.f32 %v1793, %v1890
          %v1892 = vpop.f32.mrf.mxu0
          %1893 = vmatprep.mubr.bf16.mxu0 0
          %1894 = vmatmul.mubr.bf16.gmra.mxu0 %v1835
          %v1895 = vpop.f32.mrf.mxu0
          %v1896 = vadd.f32 %v1798, %v1895
          %v1897 = vpop.f32.mrf.mxu0
          %v1898 = vpop.f32.mrf.mxu0
          %v1899 = vadd.f32 %v1803, %v1898
          %v1900 = vpop.f32.mrf.mxu0
          %1901 = vdwg.mxu0
          %v1902 = vld [vmem:[#allocation2] sm:$0xff]
          %v1903 = vld [vmem:[#allocation2 + $0x8] sm:$0xff]
          %v1904 = vld [vmem:[#allocation2 + $0x10] sm:$0xff]
          %v1905 = vld [vmem:[#allocation2 + $0x18] sm:$0xff]
          %v1906 = vadd.f32 %v1902, %v1872
          %v1907 = vadd.f32 %v1903, %v1875
          %v1908 = vadd.f32 %v1904, %v1880
          %v1909 = vadd.f32 %v1905, %v1883
          %v1910 = vmul.f32 %v1906, %v640
          %v1911 = vmul.f32 %v1907, %v640
          %v1912 = vmul.f32 %v1908, %v640
          %v1913 = vmul.f32 %v1909, %v640
          %1914 = vst [vmem:[#allocation2] sm:$0xff] %v1910
          %1915 = vst [vmem:[#allocation2 + $0x8] sm:$0xff] %v1911
          %1916 = vst [vmem:[#allocation2 + $0x10] sm:$0xff] %v1912
          %1917 = vst [vmem:[#allocation2 + $0x18] sm:$0xff] %v1913
          %v1918 = vld [vmem:[#allocation3] sm:$0xff]
          %v1919 = vld [vmem:[#allocation3 + $0x8] sm:$0xff]
          %v1920 = vld [vmem:[#allocation3 + $0x10] sm:$0xff]
          %v1921 = vld [vmem:[#allocation3 + $0x18] sm:$0xff]
          %v1922 = vadd.f32 %v1918, %v1888
          %v1923 = vadd.f32 %v1919, %v1891
          %v1924 = vadd.f32 %v1920, %v1896
          %v1925 = vadd.f32 %v1921, %v1899
          %1926 = vst [vmem:[#allocation3] sm:$0xff] %v1922
          %1927 = vst [vmem:[#allocation3 + $0x8] sm:$0xff] %v1923
          %1928 = vst [vmem:[#allocation3 + $0x10] sm:$0xff] %v1924
          %1929 = vst [vmem:[#allocation3 + $0x18] sm:$0xff] %v1925
        $region92: #{tpu_custom_call.1} parent=67 // pred_fallthru
          _
        // Predicated region
        $region93: #{tpu_custom_call.1} parent=67 // pred_check
          %p1930 = pneg %p1317
        $region94: #{tpu_custom_call.1} parent=67 // pred_check_branch
          %1932 = sbr.rel (%p1930) target = $region96
        $region95: #{tpu_custom_call.1} parent=67 // pred_region
          %v1933 = vld [vmem:[%s627] sm:$0xf]
          %v1934 = vld [vmem:[%s627 + $0x4] sm:$0xf]
          %v1935 = vld [vmem:[%s627 + $0x8] sm:$0xf]
          %v1936 = vld [vmem:[%s627 + $0xc] sm:$0xf]
          %v1937 = vld [vmem:[%s632] sm:$0xff]
          %v1938 = vld [vmem:[%s632 + $0x8] sm:$0xff]
          %v1939 = vld [vmem:[%s632 + $0x10] sm:$0xff]
          %v1940 = vld [vmem:[%s632 + $0x18] sm:$0xff]
          %1942 = vset.pattern.permute.xlu0 0
          %1943 = vperm.xlu0 %1942, %v1937
          %v1944 = vpop.permute.xlu0 %1943
          %1947 = vset.pattern.permute.xlu0 0
          %1948 = vperm.xlu0 %1947, %v1938
          %v1949 = vpop.permute.xlu0 %1948
          %1952 = vset.pattern.permute.xlu0 0
          %1953 = vperm.xlu0 %1952, %v1939
          %v1954 = vpop.permute.xlu0 %1953
          %1957 = vset.pattern.permute.xlu0 0
          %1958 = vperm.xlu0 %1957, %v1940
          %v1959 = vpop.permute.xlu0 %1958
          %v1965 = vunpack.c.l.b16 %v1933
          %v1966 = vunpack.c.l.b16 %v1934
          %v1967 = vunpack.c.l.b16 %v1935
          %v1968 = vunpack.c.l.b16 %v1936
          %v1969 = vpack.c.b16 %v1966, %v1965
          %v1970 = vpack.c.b16 %v1968, %v1967
          %v1972 = vsel %vm1633, %v1969, 0
          %v1975 = vsel %vm1633, %v1970, 0
          %1977 = vmatprep.subr.bf16.mxu0 0
          %1978 = vmatpush1.bf16.msra.mxu0 0
          %1979 = vmatprep.subr.bf16.mxu0 0
          %1980 = vmatpush1.bf16.msra.mxu0 0
          %1981 = vmatprep.subr.bf16.mxu0 0
          %1982 = vmatpush1.bf16.msra.mxu0 0
          %1983 = vmatprep.subr.bf16.mxu0 0
          %1984 = vmatpush1.bf16.msra.mxu0 0
          %1985 = vmatprep.subr.bf16.mxu0 0
          %1986 = vmatpush1.bf16.msra.mxu0 0
          %1987 = vmatprep.subr.bf16.mxu0 0
          %1988 = vmatpush1.bf16.msra.mxu0 0
          %1989 = vmatprep.subr.bf16.mxu0 0
          %1990 = vmatpush1.bf16.msra.mxu0 %v1744
          %1991 = vmatprep.subr.bf16.mxu0 0
          %1992 = vmatpush1.bf16.msra.mxu0 %v1743
          %1993 = vmatprep.subr.bf16.mxu0 0
          %1994 = vmatpush2.bf16.msra.mxu0 0
          %1995 = vmatprep.subr.bf16.mxu0 0
          %1996 = vmatpush2.bf16.msra.mxu0 0
          %1997 = vmatprep.subr.bf16.mxu0 0
          %1998 = vmatpush2.bf16.msra.mxu0 0
          %1999 = vmatprep.subr.bf16.mxu0 0
          %2000 = vmatpush2.bf16.msra.mxu0 0
          %2001 = vmatprep.subr.bf16.mxu0 0
          %2002 = vmatpush2.bf16.msra.mxu0 0
          %2003 = vmatprep.subr.bf16.mxu0 0
          %2004 = vmatpush2.bf16.msra.mxu0 0
          %2005 = vmatprep.subr.bf16.mxu0 0
          %2006 = vmatpush2.bf16.msra.mxu0 0
          %2007 = vmatprep.subr.bf16.mxu0 0
          %2008 = vmatpush2.bf16.msra.mxu0 0
          %2009 = vmatprep.mubr.bf16.mxu0 0
          %2010 = vmatmul.mubr.bf16.gmra.mxu0 %v1972
          %v2011 = vpop.f32.mrf.mxu0
          %v2012 = vadd.f32 %v1944, %v2011
          %v2013 = vpop.f32.mrf.mxu0
          %v2014 = vpop.f32.mrf.mxu0
          %v2015 = vadd.f32 %v1949, %v2014
          %v2016 = vpop.f32.mrf.mxu0
          %2017 = vmatprep.mubr.bf16.mxu0 0
          %2018 = vmatmul.mubr.bf16.gmra.mxu0 %v1975
          %v2019 = vpop.f32.mrf.mxu0
          %v2020 = vadd.f32 %v1954, %v2019
          %v2021 = vpop.f32.mrf.mxu0
          %v2022 = vpop.f32.mrf.mxu0
          %v2023 = vadd.f32 %v1959, %v2022
          %v2024 = vpop.f32.mrf.mxu0
          %2025 = vdwg.mxu0
          %v2026 = vld [vmem:[#allocation3] sm:$0xff]
          %v2027 = vld [vmem:[#allocation3 + $0x8] sm:$0xff]
          %v2028 = vld [vmem:[#allocation3 + $0x10] sm:$0xff]
          %v2029 = vld [vmem:[#allocation3 + $0x18] sm:$0xff]
          %v2030 = vadd.f32 %v2026, %v2012
          %v2031 = vadd.f32 %v2027, %v2015
          %v2032 = vadd.f32 %v2028, %v2020
          %v2033 = vadd.f32 %v2029, %v2023
          %v2034 = vpack.c.bf16 %v2031, %v2030
          %v2035 = vpack.c.bf16 %v2033, %v2032
          %v2036 = vld [vmem:[%s9] sm:$0x3]
          %v2037 = vld [vmem:[%s10] sm:$0xf]
          %2039 = vset.pattern.permute.xlu0 0
          %2040 = vperm.xlu0 %2039, %v2037
          %v2041 = vpop.permute.xlu0 %2040
          %v2044 = vsel %vm1633, %v2036, 0
          %2046 = vmatprep.subr.bf16.mxu0 0
          %2047 = vmatpush1.bf16.msra.mxu0 0
          %2048 = vmatprep.subr.bf16.mxu0 0
          %2049 = vmatpush1.bf16.msra.mxu0 0
          %2050 = vmatprep.subr.bf16.mxu0 0
          %2051 = vmatpush1.bf16.msra.mxu0 0
          %2052 = vmatprep.subr.bf16.mxu0 0
          %2053 = vmatpush1.bf16.msra.mxu0 0
          %2054 = vmatprep.subr.bf16.mxu0 0
          %2055 = vmatpush1.bf16.msra.mxu0 0
          %2056 = vmatprep.subr.bf16.mxu0 0
          %2057 = vmatpush1.bf16.msra.mxu0 0
          %2058 = vmatprep.subr.bf16.mxu0 0
          %2059 = vmatpush1.bf16.msra.mxu0 %v2035
          %2060 = vmatprep.subr.bf16.mxu0 0
          %2061 = vmatpush1.bf16.msra.mxu0 %v2034
          %2062 = vmatprep.subr.bf16.mxu0 0
          %2063 = vmatpush2.bf16.msra.mxu0 0
          %2064 = vmatprep.subr.bf16.mxu0 0
          %2065 = vmatpush2.bf16.msra.mxu0 0
          %2066 = vmatprep.subr.bf16.mxu0 0
          %2067 = vmatpush2.bf16.msra.mxu0 0
          %2068 = vmatprep.subr.bf16.mxu0 0
          %2069 = vmatpush2.bf16.msra.mxu0 0
          %2070 = vmatprep.subr.bf16.mxu0 0
          %2071 = vmatpush2.bf16.msra.mxu0 0
          %2072 = vmatprep.subr.bf16.mxu0 0
          %2073 = vmatpush2.bf16.msra.mxu0 0
          %2074 = vmatprep.subr.bf16.mxu0 0
          %2075 = vmatpush2.bf16.msra.mxu0 0
          %2076 = vmatprep.subr.bf16.mxu0 0
          %2077 = vmatpush2.bf16.msra.mxu0 0
          %2078 = vmatprep.mubr.bf16.mxu0 0
          %2079 = vmatmul.mubr.bf16.gmra.mxu0 %v2044
          %v2080 = vpop.f32.mrf.mxu0
          %v2081 = vadd.f32 %v2041, %v2080
          %v2082 = vpop.f32.mrf.mxu0
          %v2083 = vpop.f32.mrf.mxu0
          %v2084 = vpop.f32.mrf.mxu0
          %2085 = vdwg.mxu0
          %v2086 = vmul.f32 %v2081, %v640
          %v2087 = vld [vmem:[%s11] sm:$0x3]
          %v2088 = vld [vmem:[%s12] sm:$0xf]
          %2090 = vset.pattern.permute.xlu0 0
          %2091 = vperm.xlu0 %2090, %v2088
          %v2092 = vpop.permute.xlu0 %2091
          %v2095 = vsel %vm1633, %v2087, 0
          %2097 = vmatprep.subr.bf16.mxu0 0
          %2098 = vmatpush1.bf16.msra.mxu0 0
          %2099 = vmatprep.subr.bf16.mxu0 0
          %2100 = vmatpush1.bf16.msra.mxu0 0
          %2101 = vmatprep.subr.bf16.mxu0 0
          %2102 = vmatpush1.bf16.msra.mxu0 0
          %2103 = vmatprep.subr.bf16.mxu0 0
          %2104 = vmatpush1.bf16.msra.mxu0 0
          %2105 = vmatprep.subr.bf16.mxu0 0
          %2106 = vmatpush1.bf16.msra.mxu0 0
          %2107 = vmatprep.subr.bf16.mxu0 0
          %2108 = vmatpush1.bf16.msra.mxu0 0
          %2109 = vmatprep.subr.bf16.mxu0 0
          %2110 = vmatpush1.bf16.msra.mxu0 %v2035
          %2111 = vmatprep.subr.bf16.mxu0 0
          %2112 = vmatpush1.bf16.msra.mxu0 %v2034
          %2113 = vmatprep.subr.bf16.mxu0 0
          %2114 = vmatpush2.bf16.msra.mxu0 0
          %2115 = vmatprep.subr.bf16.mxu0 0
          %2116 = vmatpush2.bf16.msra.mxu0 0
          %2117 = vmatprep.subr.bf16.mxu0 0
          %2118 = vmatpush2.bf16.msra.mxu0 0
          %2119 = vmatprep.subr.bf16.mxu0 0
          %2120 = vmatpush2.bf16.msra.mxu0 0
          %2121 = vmatprep.subr.bf16.mxu0 0
          %2122 = vmatpush2.bf16.msra.mxu0 0
          %2123 = vmatprep.subr.bf16.mxu0 0
          %2124 = vmatpush2.bf16.msra.mxu0 0
          %2125 = vmatprep.subr.bf16.mxu0 0
          %2126 = vmatpush2.bf16.msra.mxu0 0
          %2127 = vmatprep.subr.bf16.mxu0 0
          %2128 = vmatpush2.bf16.msra.mxu0 0
          %2129 = vmatprep.mubr.bf16.mxu0 0
          %2130 = vmatmul.mubr.bf16.gmra.mxu0 %v2095
          %v2131 = vpop.f32.mrf.mxu0
          %v2132 = vadd.f32 %v2092, %v2131
          %v2133 = vpop.f32.mrf.mxu0
          %v2134 = vpop.f32.mrf.mxu0
          %v2135 = vpop.f32.mrf.mxu0
          %2136 = vdwg.mxu0
          %v2137 = vmul.f32 %v2132, %v640
          %v2138 = vld [vmem:[%s612] sm:$0xf]
          %v2139 = vmul.f32 %v2137, 1.442695
          %v2140 = vpow.pop %v2139
          %v2141 = vmul.f32 %v2138, %v2140
          %v2142 = vadd.f32 %v2086, %v2141
          %v2143 = vmul.f32 %v2142, %v640
          %2144 = vst [vmem:[%s584] sm:$0xf] %v2143
          %2145 = vst [vmem:[%s591] sm:$0xf] %v2086
          %2146 = vst [vmem:[%s598] sm:$0xf] %v2137
          %2147 = vst [vmem:[%s604] sm:$0x1] %v640
        $region96: #{tpu_custom_call.1} parent=67 // pred_fallthru
          _
        %s2148 = sand.u32 %s345, 1
        %s2149 = scalar_lea.sflag [#allocation9], %s2148
        %s2150 = sand.u32 %s345, 1
        %s2151 = smul.addr %s2150, 4
        %s2152 = scalar_lea.vmem [#allocation8], %s2151
        %s2153 = sand.u32 %s43, 1
        %s2154 = scalar_lea.sflag [#allocation11], %s2153
        %s2155 = sand.u32 %s371, 1
        %s2156 = smul.addr %s2155, 4
        %s2157 = scalar_lea.vmem [#allocation10], %s2156
        %s2158 = sand.u32 %s43, 1
        %s2159 = scalar_lea.sflag [#allocation11], %s2158
        %s2160 = sand.u32 %s397, 1
        %s2161 = smul.addr %s2160, 4
        %s2162 = scalar_lea.vmem [#allocation12], %s2161
        %s2163 = sand.u32 %s423, 1
        %s2164 = scalar_lea.sflag [#allocation14], %s2163
        %s2165 = sand.u32 %s423, 1
        %s2166 = scalar_lea.vmem [#allocation13], %s2165
        // Predicated region
        $region97: #{tpu_custom_call.1} parent=67 // pred_check
          %p2167 = pneg %p355
        $region98: #{tpu_custom_call.1} parent=67 // pred_check_branch
          %2169 = sbr.rel (%p2167) target = $region100
        $region99: #{tpu_custom_call.1} parent=67 // pred_region
          %s2171 = ssub.s32 64, 64
          %2172 = vsyncadd %s2149, %s2171
          %s2173 = smul.addr %s47, 64
          %s2174 = scalar_lea.hbm %s13, %s2173
          %s2176 = sshll.u32 %s2152, 4
          %s2177 = int_to_ptr.vmem [resolvable:$true] %s2176
          %2179 = dma.vmem_to_hbm [thread:$0]  %s2177, 64, %s2174, %s2149
        $region100: #{tpu_custom_call.1} parent=67 // pred_fallthru
          _
        // Predicated region
        $region101: #{tpu_custom_call.1} parent=67 // pred_check
          %p2180 = pneg %p381
        $region102: #{tpu_custom_call.1} parent=67 // pred_check_branch
          %2182 = sbr.rel (%p2180) target = $region104
        $region103: #{tpu_custom_call.1} parent=67 // pred_region
          %s2184 = ssub.s32 64, 64
          %2185 = vsyncadd %s2154, %s2184
          %s2186 = smul.addr %s47, 64
          %s2187 = scalar_lea.hbm %s14, %s2186
          %s2189 = sshll.u32 %s2157, 4
          %s2190 = int_to_ptr.vmem [resolvable:$true] %s2189
          %2192 = dma.vmem_to_hbm [thread:$0]  %s2190, 64, %s2187, %s2154
        $region104: #{tpu_custom_call.1} parent=67 // pred_fallthru
          _
        // Predicated region
        $region105: #{tpu_custom_call.1} parent=67 // pred_check
          %p2193 = pneg %p407
        $region106: #{tpu_custom_call.1} parent=67 // pred_check_branch
          %2195 = sbr.rel (%p2193) target = $region108
        $region107: #{tpu_custom_call.1} parent=67 // pred_region
          %s2197 = ssub.s32 64, 64
          %2198 = vsyncadd %s2159, %s2197
          %s2199 = smul.addr %s47, 64
          %s2200 = scalar_lea.hbm %s15, %s2199
          %s2202 = sshll.u32 %s2162, 4
          %s2203 = int_to_ptr.vmem [resolvable:$true] %s2202
          %2205 = dma.vmem_to_hbm [thread:$0]  %s2203, 64, %s2200, %s2159
        $region108: #{tpu_custom_call.1} parent=67 // pred_fallthru
          _
        // Predicated region
        $region109: #{tpu_custom_call.1} parent=67 // pred_check
          %p2206 = pneg %p433
        $region110: #{tpu_custom_call.1} parent=67 // pred_check_branch
          %2208 = sbr.rel (%p2206) target = $region112
        $region111: #{tpu_custom_call.1} parent=67 // pred_region
          %s2210 = ssub.s32 16, 16
          %2211 = vsyncadd %s2164, %s2210
          %s2212 = smul.addr %s47, 16
          %s2213 = scalar_lea.hbm %s16, %s2212
          %s2215 = sshll.u32 %s2166, 4
          %s2216 = int_to_ptr.vmem [resolvable:$true] %s2215
          %2218 = dma.vmem_to_hbm [thread:$0]  %s2216, 16, %s2213, %s2164
        $region112: #{tpu_custom_call.1} parent=67 // pred_fallthru
          _
      $region68: #{tpu_custom_call.1} parent=5 // pred_fallthru
        _
      %p2219 = scmp.le.s32.totalorder 2, %s38
      // Predicated region
      $region113: #{tpu_custom_call.1} parent=5 // pred_check
        %p2220 = pneg %p2219
      $region114: #{tpu_custom_call.1} parent=5 // pred_check_branch
        %2222 = sbr.rel (%p2220) target = $region116
      $region115: #{tpu_custom_call.1} parent=5 // pred_region
        %s2223 = ssub.s32 %s38, 2
        // Predicated region
        $region117: #{tpu_custom_call.1} parent=115 // pred_check
          %p2224 = pneg %p361
        $region118: #{tpu_custom_call.1} parent=115 // pred_check_branch
          %2226 = sbr.rel (%p2224) target = $region120
        $region119: #{tpu_custom_call.1} parent=115 // pred_region
          %s2227 = sand.u32 %s346, 1
          %s2228 = scalar_lea.sflag [#allocation9], %s2227
          %s2229 = sand.u32 %s346, 1
          %s2230 = smul.addr %s2229, 4
          %s2231 = scalar_lea.vmem [#allocation8], %s2230
          %2232 = dma.done %s2228, 64
        $region120: #{tpu_custom_call.1} parent=115 // pred_fallthru
          _
        // Predicated region
        $region121: #{tpu_custom_call.1} parent=115 // pred_check
          %p2233 = pneg %p387
        $region122: #{tpu_custom_call.1} parent=115 // pred_check_branch
          %2235 = sbr.rel (%p2233) target = $region124
        $region123: #{tpu_custom_call.1} parent=115 // pred_region
          %s2236 = sand.u32 %s44, 1
          %s2237 = scalar_lea.sflag [#allocation11], %s2236
          %s2238 = sand.u32 %s372, 1
          %s2239 = smul.addr %s2238, 4
          %s2240 = scalar_lea.vmem [#allocation10], %s2239
          %2241 = dma.done %s2237, 64
        $region124: #{tpu_custom_call.1} parent=115 // pred_fallthru
          _
        // Predicated region
        $region125: #{tpu_custom_call.1} parent=115 // pred_check
          %p2242 = pneg %p413
        $region126: #{tpu_custom_call.1} parent=115 // pred_check_branch
          %2244 = sbr.rel (%p2242) target = $region128
        $region127: #{tpu_custom_call.1} parent=115 // pred_region
          %s2245 = sand.u32 %s44, 1
          %s2246 = scalar_lea.sflag [#allocation11], %s2245
          %s2247 = sand.u32 %s398, 1
          %s2248 = smul.addr %s2247, 4
          %s2249 = scalar_lea.vmem [#allocation12], %s2248
          %2250 = dma.done %s2246, 64
        $region128: #{tpu_custom_call.1} parent=115 // pred_fallthru
          _
        // Predicated region
        $region129: #{tpu_custom_call.1} parent=115 // pred_check
          %p2251 = pneg %p439
        $region130: #{tpu_custom_call.1} parent=115 // pred_check_branch
          %2253 = sbr.rel (%p2251) target = $region132
        $region131: #{tpu_custom_call.1} parent=115 // pred_region
          %s2254 = sand.u32 %s424, 1
          %s2255 = scalar_lea.sflag [#allocation14], %s2254
          %s2256 = sand.u32 %s424, 1
          %s2257 = scalar_lea.vmem [#allocation13], %s2256
          %2258 = dma.done %s2255, 16
        $region132: #{tpu_custom_call.1} parent=115 // pred_fallthru
          _
      $region116: #{tpu_custom_call.1} parent=5 // pred_fallthru
        _
    $region6: #{tpu_custom_call.1} parent=1 // loop_footer
      %s42 = sadd.s32 1, %s38
    $region7: #{tpu_custom_call.1} parent=1 // loop_footer_branch
      %37 = sbr.rel target = $region3
    $region8: #{tpu_custom_call.1} parent=1 // loop_exit
      _
    %2259 = vsyncpa [#allocation9], 1
    %s2260 = scalar_lea.sflag [#allocation9], 1
    %2261 = vsyncpa %s2260, 1
    %2262 = vsyncpa [#allocation11], 1
    %s2263 = scalar_lea.sflag [#allocation11], 1
    %2264 = vsyncpa %s2263, 1
    %2265 = vsyncpa [#allocation14], 1
    %s2266 = scalar_lea.sflag [#allocation14], 1
    %2267 = vsyncpa %s2266, 1

</llo_original>
